<compile_context>
chip_gen: v7x
topology: tpu7x:2x2x1
jax: 0.10.0
libtpu: 0.0.40
codegen_flags: <defaults>
</compile_context>

<pallas_src>
import jax
import jax.numpy as jnp
from jax.experimental import pallas as pl
from jax.experimental.pallas import tpu as pltpu

LANE = 128                       # pad every matmul lane dim to this
SUBLANE = 8
VMEM_BUDGET_BYTES = 48 * 1024 * 1024   # conservative (v7x physical VMEM = 64 MiB)


def _round_up(n, m):
    return ((n + m - 1) // m) * m


def _half_tile(tb):
    return max(SUBLANE, ((tb // 2) // SUBLANE) * SUBLANE)


# ---------------------------------------------------------------------------
# Kernel
# ---------------------------------------------------------------------------
def _make_kernel(fused_head):
    def kernel(x_ref, g_ref, w0_ref, b0_ref, w1e_ref, w1g_ref, b1_ref,
               w2_ref, b2_ref, *rest):
        if fused_head:
            wh_ref, bh_ref, o_ref = rest
        else:
            (o_ref,) = rest

        wdt = w0_ref.dtype   # weight compute dtype (f32 here; bf16 on v6e/v7x)

        # fc0: embed = x @ W0 + b0  (kept thin, not folded into fc1)
        e = jnp.dot(x_ref[...], w0_ref[...],
                    preferred_element_type=jnp.float32) + b0_ref[...]

        # fc1 on concat(embed, goal) WITHOUT materializing the concat
        h = (jnp.dot(e.astype(wdt), w1e_ref[...],
                     preferred_element_type=jnp.float32)
             + jnp.dot(g_ref[...], w1g_ref[...],
                       preferred_element_type=jnp.float32)
             + b1_ref[...])
        h = jnp.maximum(h, 0.0)

        # fc2 + ReLU
        z = jnp.dot(h.astype(wdt), w2_ref[...],
                    preferred_element_type=jnp.float32) + b2_ref[...]
        z = jnp.maximum(z, 0.0)

        if fused_head:
            # block-diagonal out_head: (TB, od*8) @ (od*8, od*state_dim)
            d = jnp.dot(z.astype(wdt), wh_ref[...],
                        preferred_element_type=jnp.float32) + bh_ref[...]
            o_ref[...] = d.astype(o_ref.dtype)
        else:
            o_ref[...] = z.astype(o_ref.dtype)

    return kernel


# ---------------------------------------------------------------------------
# One-time parameter preparation (hoisted out of the per-call forward)
# ---------------------------------------------------------------------------
def prepare_params(params, *, output_dim, state_dim, param_dtype=jnp.float32,
                   max_fused_head_output_dim=16):
    """Pads / fuses the module parameters once.  Weights are (in, out)."""
    w0, b0, w1e, w1g, b1, w2, b2, wh, bh = params
    V, E = w0.shape
    H = w1e.shape[1]
    N2 = w2.shape[1]                      # output_dim * 8
    S = wh.shape[1]                       # state_dim
    assert N2 == output_dim * 8 and S == state_dim and w1g.shape[0] == output_dim

    Vp, Ep, Gp, Hp, N2p = (_round_up(v, LANE) for v in (V, E, output_dim, H, N2))
    NO = output_dim * state_dim
    NOp = _round_up(NO, LANE)

    def padw(w, rows, cols):
        w = jnp.pad(w, ((0, rows - w.shape[0]), (0, cols - w.shape[1])))
        return w.astype(param_dtype)

    def padb(b, cols):
        # biases stay f32: the bias-add / ReLU epilogue runs in f32 on all chips
        return jnp.pad(b, (0, cols - b.shape[0])).reshape(1, -1).astype(jnp.float32)

    # kron head grows quadratically in output_dim -> only fuse it when small;
    # otherwise the kernel emits (B, od*8) and the head runs as a wrapper einsum.
    fused_head = output_dim <= max_fused_head_output_dim

    prepared = {
        "w0": padw(w0, Vp, Ep), "b0": padb(b0, Ep),
        "w1e": padw(w1e, Ep, Hp), "w1g": padw(w1g, Gp, Hp), "b1": padb(b1, Hp),
        "w2": padw(w2, Hp, N2p), "b2": padb(b2, N2p),
        "wh": wh, "bh": bh,
        "fused_head": fused_head,
        "param_dtype": jnp.dtype(param_dtype),
        "dims": dict(V=V, Vp=Vp, E=E, Ep=Ep, G=output_dim, Gp=Gp, H=H, Hp=Hp,
                     N2=N2, N2p=N2p, NO=NO, NOp=NOp, S=state_dim,
                     output_dim=output_dim),
    }
    if fused_head:
        w_head = jnp.kron(jnp.eye(output_dim, dtype=wh.dtype), wh)  # (od*8, od*S)
        b_head = jnp.tile(bh, output_dim)                           # (od*S,)
        prepared["w_head"] = padw(w_head, N2p, NOp)
        prepared["b_head"] = padb(b_head, NOp)
    return prepared


def _weight_args(prepared):
    args = [prepared["w0"], prepared["b0"], prepared["w1e"], prepared["w1g"],
            prepared["b1"], prepared["w2"], prepared["b2"]]
    if prepared["fused_head"]:
        args += [prepared["w_head"], prepared["b_head"]]
    return args


def _choose_tile_b(B, tile_b):
    """Batch tile: single un-padded program for small B; otherwise a multiple
    of 8 bounded by pad waste, with >=2 grid steps when splitting is cheap."""
    if B <= tile_b:
        half = _round_up(-(-B // 2), SUBLANE)
        # split in two (both v7x TensorCores busy) only if the pad waste is tiny
        if B >= 8 * SUBLANE and 2 * half - B <= max(half // 4, SUBLANE):
            return half
        return B
    tb = max(SUBLANE, (tile_b // SUBLANE) * SUBLANE)
    while tb > SUBLANE and (_round_up(B, tb) - B) > tb // 2:
        tb = _half_tile(tb)
    return tb


# ---------------------------------------------------------------------------
# Forward
# ---------------------------------------------------------------------------
def outside_state_model_forward(x, goal_state, prepared, *, tile_b=256):
    """x: (B, vocab_size), goal_state: (B, output_dim)
    returns: (B, output_dim, state_dim)"""
    d = prepared["dims"]
    fused_head = prepared["fused_head"]
    pdt = prepared["param_dtype"]
    B = x.shape[0]
    assert x.shape == (B, d["V"]) and goal_state.shape == (B, d["G"])

    out_cols = d["NOp"] if fused_head else d["N2p"]
    weight_args = _weight_args(prepared)
    x_itemsize = pdt.itemsize

    def vmem_need(tb_):
        # worst case: weights double-buffered (if Buffered(1) is unavailable),
        # x/goal/out tiles double-buffered, f32 intermediates.
        wbytes = sum(int(w.size) * w.dtype.itemsize for w in weight_args)
        act = 2 * tb_ * ((d["Vp"] + d["Gp"]) * x_itemsize + out_cols * 4)
        inter = tb_ * (d["Ep"] + d["Hp"] + d["N2p"] + out_cols) * 4
        return 2 * wbytes + act + inter

    tb = _choose_tile_b(B, tile_b)
    while tb > SUBLANE and tb % SUBLANE == 0 and vmem_need(tb) > VMEM_BUDGET_BYTES:
        tb = _half_tile(tb)
    b_pad = _round_up(B, tb)
    grid = (b_pad // tb,)
    vmem_limit = int(min(max(vmem_need(tb) * 3 // 2, 32 * 1024 * 1024),
                         64 * 1024 * 1024))

    # activation padding only when actually needed (no-op at aligned prod shapes)
    xp = x.astype(pdt)
    gp = goal_state.astype(pdt)
    if b_pad != B or d["Vp"] != d["V"]:
        xp = jnp.pad(xp, ((0, b_pad - B), (0, d["Vp"] - d["V"])))
    if b_pad != B or d["Gp"] != d["G"]:
        gp = jnp.pad(gp, ((0, b_pad - B), (0, d["Gp"] - d["G"])))

    flops = 2 * b_pad * (d["Vp"] * d["Ep"] + d["Ep"] * d["Hp"]
                         + d["Gp"] * d["Hp"] + d["Hp"] * d["N2p"]
                         + (d["N2p"] * d["NOp"] if fused_head else 0))
    bytes_accessed = (int(xp.size) * x_itemsize + int(gp.size) * x_itemsize
                      + sum(int(w.size) * w.dtype.itemsize for w in weight_args)
                      + b_pad * out_cols * 4)
    cost = pl.CostEstimate(flops=flops, transcendentals=0,
                           bytes_accessed=bytes_accessed)

    def build(buffered_weights):
        def resident(shape):
            # constant index map -> fetched once, stays VMEM-resident
            if buffered_weights:
                return pl.BlockSpec(shape, lambda i: (0, 0),
                                    pipeline_mode=pl.Buffered(1))
            return pl.BlockSpec(shape, lambda i: (0, 0))

        in_specs = [
            pl.BlockSpec((tb, d["Vp"]), lambda i: (i, 0)),   # x tile (pipelined)
            pl.BlockSpec((tb, d["Gp"]), lambda i: (i, 0)),   # goal tile
            resident((d["Vp"], d["Ep"])), resident((1, d["Ep"])),   # fc0
            resident((d["Ep"], d["Hp"])), resident((d["Gp"], d["Hp"])),
            resident((1, d["Hp"])),                                  # fc1
            resident((d["Hp"], d["N2p"])), resident((1, d["N2p"])),  # fc2
        ]
        if fused_head:
            in_specs += [resident((d["N2p"], d["NOp"])),
                         resident((1, d["NOp"]))]                    # out_head

        return pl.pallas_call(
            _make_kernel(fused_head),
            out_shape=jax.ShapeDtypeStruct((b_pad, out_cols), jnp.float32),
            grid=grid,
            in_specs=in_specs,
            out_specs=pl.BlockSpec((tb, out_cols), lambda i: (i, 0)),
            compiler_params=pltpu.CompilerParams(
                dimension_semantics=("parallel",),
                vmem_limit_bytes=vmem_limit),
            cost_estimate=cost,
        )

    args = (xp, gp, *weight_args)
    try:
        flat = build(buffered_weights=True)(*args)
    except Exception:
        # pl.Buffered(1) on resident weights unsupported on this jax build —
        # fall back to default double-buffering (correctness unaffected).
        flat = build(buffered_weights=False)(*args)

    if fused_head:
        return flat[:B, :d["NO"]].reshape(B, d["output_dim"], d["S"])
    # large-output_dim path: head applied as a wrapper-side einsum
    z = flat[:B, :d["N2"]].reshape(B, d["output_dim"], 8)
    return z @ prepared["wh"].astype(jnp.float32) + prepared["bh"]


# ---------------------------------------------------------------------------
# Synthetic params + pure-JAX reference (mirrors the PyTorch forward)
# ---------------------------------------------------------------------------
def init_params(key, *, output_dim, hidden_dim, state_dim, vocab_size, embed_size=16):
    ks = jax.random.split(key, 8)
    scale = 0.1
    w0 = scale * jax.random.normal(ks[0], (vocab_size, embed_size), jnp.float32)
    b0 = scale * jax.random.normal(ks[1], (embed_size,), jnp.float32)
    # fc1 input = concat(embed, goal) -> W1 split along the input axis
    w1e = scale * jax.random.normal(ks[2], (embed_size, hidden_dim), jnp.float32)
    w1g = scale * jax.random.normal(ks[3], (output_dim, hidden_dim), jnp.float32)
    b1 = scale * jax.random.normal(ks[4], (hidden_dim,), jnp.float32)
    w2 = scale * jax.random.normal(ks[5], (hidden_dim, output_dim * 8), jnp.float32)
    b2 = scale * jax.random.normal(ks[6], (output_dim * 8,), jnp.float32)
    wh = scale * jax.random.normal(ks[7], (8, state_dim), jnp.float32)
    bh = jnp.linspace(-0.05, 0.05, state_dim, dtype=jnp.float32)
    return (w0, b0, w1e, w1g, b1, w2, b2, wh, bh)


def reference_forward(x, goal_state, params, *, output_dim):
    w0, b0, w1e, w1g, b1, w2, b2, wh, bh = params
    embed = x @ w0 + b0
    cat_w1 = jnp.concatenate([w1e, w1g], axis=0)
    cat_in = jnp.concatenate([embed, goal_state], axis=-1)
    h = jax.nn.relu(cat_in @ cat_w1 + b1)
    out = jax.nn.relu(h @ w2 + b2)
    out = out.reshape(-1, output_dim, 8)
    return out @ wh + bh


if __name__ == "__main__":
    batch = 2
    vocab_size = 32
    output_dim = 4
    hidden_dim = 32
    state_dim = 8
    embed_size = 16

    key = jax.random.PRNGKey(0)
    k_x, k_g, k_p = jax.random.split(key, 3)

    x = jax.random.normal(k_x, (batch, vocab_size), jnp.float32)
    goal_state = jax.random.normal(k_g, (batch, output_dim), jnp.float32)

    params = init_params(k_p, output_dim=output_dim, hidden_dim=hidden_dim,
                         state_dim=state_dim, vocab_size=vocab_size,
                         embed_size=embed_size)
    prepared = prepare_params(params, output_dim=output_dim, state_dim=state_dim)

    out = jax.block_until_ready(
        outside_state_model_forward(x, goal_state, prepared))
    ref = reference_forward(x, goal_state, params, output_dim=output_dim)
    assert out.shape == (batch, output_dim, state_dim)
    assert jnp.allclose(out, ref, atol=1e-4, rtol=1e-4)

    # second check: multi-tile batch path (grid > 1, batch padding exercised)
    b2 = 20
    k_x2, k_g2 = jax.random.split(jax.random.PRNGKey(1), 2)
    x2 = jax.random.normal(k_x2, (b2, vocab_size), jnp.float32)
    g2 = jax.random.normal(k_g2, (b2, output_dim), jnp.float32)
    out2 = jax.block_until_ready(
        outside_state_model_forward(x2, g2, prepared, tile_b=8))
    ref2 = reference_forward(x2, g2, params, output_dim=output_dim)
    assert out2.shape == (b2, output_dim, state_dim)
    assert jnp.allclose(out2, ref2, atol=1e-4, rtol=1e-4)

    print("KERNEL_OK")
</pallas_src>

<mosaic_0001>
module attributes {stable_mosaic.version = 11 : i64} {
  func.func @kernel(%arg0: i32, %arg1: memref<2x128xf32, #tpu.memory_space<vmem>>, %arg2: memref<2x128xf32, #tpu.memory_space<vmem>>, %arg3: memref<128x128xf32, #tpu.memory_space<vmem>>, %arg4: memref<1x128xf32, #tpu.memory_space<vmem>>, %arg5: memref<128x128xf32, #tpu.memory_space<vmem>>, %arg6: memref<128x128xf32, #tpu.memory_space<vmem>>, %arg7: memref<1x128xf32, #tpu.memory_space<vmem>>, %arg8: memref<128x128xf32, #tpu.memory_space<vmem>>, %arg9: memref<1x128xf32, #tpu.memory_space<vmem>>, %arg10: memref<128x128xf32, #tpu.memory_space<vmem>>, %arg11: memref<1x128xf32, #tpu.memory_space<vmem>>, %arg12: memref<2x128xf32, #tpu.memory_space<vmem>>) attributes {dimension_semantics = [#tpu.dimension_semantics<parallel>], iteration_bounds = array<i64: 1>, scalar_prefetch = 0 : i64, scratch_operands = 0 : i64, tpu.core_type = #tpu.core_type<tc>, window_params = [{transform_indices = @transform_0, window_bounds = array<i64: 2, 128>}, {transform_indices = @transform_1, window_bounds = array<i64: 2, 128>}, {pipeline_mode = #tpu.pipeline_mode<synchronous>, transform_indices = @transform_2, window_bounds = array<i64: 128, 128>}, {pipeline_mode = #tpu.pipeline_mode<synchronous>, transform_indices = @transform_3, window_bounds = array<i64: 1, 128>}, {pipeline_mode = #tpu.pipeline_mode<synchronous>, transform_indices = @transform_4, window_bounds = array<i64: 128, 128>}, {pipeline_mode = #tpu.pipeline_mode<synchronous>, transform_indices = @transform_5, window_bounds = array<i64: 128, 128>}, {pipeline_mode = #tpu.pipeline_mode<synchronous>, transform_indices = @transform_6, window_bounds = array<i64: 1, 128>}, {pipeline_mode = #tpu.pipeline_mode<synchronous>, transform_indices = @transform_7, window_bounds = array<i64: 128, 128>}, {pipeline_mode = #tpu.pipeline_mode<synchronous>, transform_indices = @transform_8, window_bounds = array<i64: 1, 128>}, {pipeline_mode = #tpu.pipeline_mode<synchronous>, transform_indices = @transform_9, window_bounds = array<i64: 128, 128>}, {pipeline_mode = #tpu.pipeline_mode<synchronous>, transform_indices = @transform_10, window_bounds = array<i64: 1, 128>}, {transform_indices = @transform_11, window_bounds = array<i64: 2, 128>}]} {
    %c0 = arith.constant 0 : index
    %c0_0 = arith.constant 0 : index
    %0 = vector.load %arg1[%c0, %c0_0] : memref<2x128xf32, #tpu.memory_space<vmem>>, vector<2x128xf32>
    %c0_1 = arith.constant 0 : index
    %c0_2 = arith.constant 0 : index
    %1 = vector.load %arg3[%c0_1, %c0_2] : memref<128x128xf32, #tpu.memory_space<vmem>>, vector<128x128xf32>
    %cst = arith.constant dense<0.000000e+00> : vector<2x128xf32>
    %2 = tpu.matmul %0, %1, %cst {dimension_numbers = #tpu.dot_dimension_numbers<[1], [0], [0], [1], [0, 0, 1, 1], [], []>} : vector<2x128xf32>, vector<128x128xf32>, vector<2x128xf32> -> vector<2x128xf32>
    %c0_3 = arith.constant 0 : index
    %c0_4 = arith.constant 0 : index
    %3 = vector.load %arg4[%c0_3, %c0_4] : memref<1x128xf32, #tpu.memory_space<vmem>>, vector<1x128xf32>
    %4 = vector.broadcast %3 : vector<1x128xf32> to vector<2x128xf32>
    %5 = arith.addf %2, %4 : vector<2x128xf32>
    %c0_5 = arith.constant 0 : index
    %c0_6 = arith.constant 0 : index
    %6 = vector.load %arg5[%c0_5, %c0_6] : memref<128x128xf32, #tpu.memory_space<vmem>>, vector<128x128xf32>
    %cst_7 = arith.constant dense<0.000000e+00> : vector<2x128xf32>
    %7 = tpu.matmul %5, %6, %cst_7 {dimension_numbers = #tpu.dot_dimension_numbers<[1], [0], [0], [1], [0, 0, 1, 1], [], []>} : vector<2x128xf32>, vector<128x128xf32>, vector<2x128xf32> -> vector<2x128xf32>
    %c0_8 = arith.constant 0 : index
    %c0_9 = arith.constant 0 : index
    %8 = vector.load %arg2[%c0_8, %c0_9] : memref<2x128xf32, #tpu.memory_space<vmem>>, vector<2x128xf32>
    %c0_10 = arith.constant 0 : index
    %c0_11 = arith.constant 0 : index
    %9 = vector.load %arg6[%c0_10, %c0_11] : memref<128x128xf32, #tpu.memory_space<vmem>>, vector<128x128xf32>
    %cst_12 = arith.constant dense<0.000000e+00> : vector<2x128xf32>
    %10 = tpu.matmul %8, %9, %cst_12 {dimension_numbers = #tpu.dot_dimension_numbers<[1], [0], [0], [1], [0, 0, 1, 1], [], []>} : vector<2x128xf32>, vector<128x128xf32>, vector<2x128xf32> -> vector<2x128xf32>
    %11 = arith.addf %7, %10 : vector<2x128xf32>
    %c0_13 = arith.constant 0 : index
    %c0_14 = arith.constant 0 : index
    %12 = vector.load %arg7[%c0_13, %c0_14] : memref<1x128xf32, #tpu.memory_space<vmem>>, vector<1x128xf32>
    %13 = vector.broadcast %12 : vector<1x128xf32> to vector<2x128xf32>
    %14 = arith.addf %11, %13 : vector<2x128xf32>
    %cst_15 = arith.constant 0.000000e+00 : f32
    %15 = vector.broadcast %cst_15 : f32 to vector<2x128xf32>
    %16 = arith.maximumf %14, %15 : vector<2x128xf32>
    %c0_16 = arith.constant 0 : index
    %c0_17 = arith.constant 0 : index
    %17 = vector.load %arg8[%c0_16, %c0_17] : memref<128x128xf32, #tpu.memory_space<vmem>>, vector<128x128xf32>
    %cst_18 = arith.constant dense<0.000000e+00> : vector<2x128xf32>
    %18 = tpu.matmul %16, %17, %cst_18 {dimension_numbers = #tpu.dot_dimension_numbers<[1], [0], [0], [1], [0, 0, 1, 1], [], []>} : vector<2x128xf32>, vector<128x128xf32>, vector<2x128xf32> -> vector<2x128xf32>
    %c0_19 = arith.constant 0 : index
    %c0_20 = arith.constant 0 : index
    %19 = vector.load %arg9[%c0_19, %c0_20] : memref<1x128xf32, #tpu.memory_space<vmem>>, vector<1x128xf32>
    %20 = vector.broadcast %19 : vector<1x128xf32> to vector<2x128xf32>
    %21 = arith.addf %18, %20 : vector<2x128xf32>
    %cst_21 = arith.constant 0.000000e+00 : f32
    %22 = vector.broadcast %cst_21 : f32 to vector<2x128xf32>
    %23 = arith.maximumf %21, %22 : vector<2x128xf32>
    %c0_22 = arith.constant 0 : index
    %c0_23 = arith.constant 0 : index
    %24 = vector.load %arg10[%c0_22, %c0_23] : memref<128x128xf32, #tpu.memory_space<vmem>>, vector<128x128xf32>
    %cst_24 = arith.constant dense<0.000000e+00> : vector<2x128xf32>
    %25 = tpu.matmul %23, %24, %cst_24 {dimension_numbers = #tpu.dot_dimension_numbers<[1], [0], [0], [1], [0, 0, 1, 1], [], []>} : vector<2x128xf32>, vector<128x128xf32>, vector<2x128xf32> -> vector<2x128xf32>
    %c0_25 = arith.constant 0 : index
    %c0_26 = arith.constant 0 : index
    %26 = vector.load %arg11[%c0_25, %c0_26] : memref<1x128xf32, #tpu.memory_space<vmem>>, vector<1x128xf32>
    %27 = vector.broadcast %26 : vector<1x128xf32> to vector<2x128xf32>
    %28 = arith.addf %25, %27 : vector<2x128xf32>
    %c0_27 = arith.constant 0 : index
    %c0_28 = arith.constant 0 : index
    %29 = vector.load %arg12[%c0_27, %c0_28] : memref<2x128xf32, #tpu.memory_space<vmem>>, vector<2x128xf32>
    tpu.vector_store %arg12[%c0_27, %c0_28], %28 {strides = array<i32>} : memref<2x128xf32, #tpu.memory_space<vmem>>, vector<2x128xf32>,
    return
  }
  func.func @transform_0(%arg0: i32) -> (i32, i32) {
    %c0_i32 = arith.constant 0 : i32
    %c0_i32_0 = arith.constant 0 : i32
    return %arg0, %c0_i32 : i32, i32
  }
  func.func @transform_1(%arg0: i32) -> (i32, i32) {
    %c0_i32 = arith.constant 0 : i32
    %c0_i32_0 = arith.constant 0 : i32
    return %arg0, %c0_i32 : i32, i32
  }
  func.func @transform_2(%arg0: i32) -> (i32, i32) {
    %c0_i32 = arith.constant 0 : i32
    %c0_i32_0 = arith.constant 0 : i32
    %c0_i32_1 = arith.constant 0 : i32
    return %c0_i32, %c0_i32_0 : i32, i32
  }
  func.func @transform_3(%arg0: i32) -> (i32, i32) {
    %c0_i32 = arith.constant 0 : i32
    %c0_i32_0 = arith.constant 0 : i32
    %c0_i32_1 = arith.constant 0 : i32
    return %c0_i32, %c0_i32_0 : i32, i32
  }
  func.func @transform_4(%arg0: i32) -> (i32, i32) {
    %c0_i32 = arith.constant 0 : i32
    %c0_i32_0 = arith.constant 0 : i32
    %c0_i32_1 = arith.constant 0 : i32
    return %c0_i32, %c0_i32_0 : i32, i32
  }
  func.func @transform_5(%arg0: i32) -> (i32, i32) {
    %c0_i32 = arith.constant 0 : i32
    %c0_i32_0 = arith.constant 0 : i32
    %c0_i32_1 = arith.constant 0 : i32
    return %c0_i32, %c0_i32_0 : i32, i32
  }
  func.func @transform_6(%arg0: i32) -> (i32, i32) {
    %c0_i32 = arith.constant 0 : i32
    %c0_i32_0 = arith.constant 0 : i32
    %c0_i32_1 = arith.constant 0 : i32
    return %c0_i32, %c0_i32_0 : i32, i32
  }
  func.func @transform_7(%arg0: i32) -> (i32, i32) {
    %c0_i32 = arith.constant 0 : i32
    %c0_i32_0 = arith.constant 0 : i32
    %c0_i32_1 = arith.constant 0 : i32
    return %c0_i32, %c0_i32_0 : i32, i32
  }
  func.func @transform_8(%arg0: i32) -> (i32, i32) {
    %c0_i32 = arith.constant 0 : i32
    %c0_i32_0 = arith.constant 0 : i32
    %c0_i32_1 = arith.constant 0 : i32
    return %c0_i32, %c0_i32_0 : i32, i32
  }
  func.func @transform_9(%arg0: i32) -> (i32, i32) {
    %c0_i32 = arith.constant 0 : i32
    %c0_i32_0 = arith.constant 0 : i32
    %c0_i32_1 = arith.constant 0 : i32
    return %c0_i32, %c0_i32_0 : i32, i32
  }
  func.func @transform_10(%arg0: i32) -> (i32, i32) {
    %c0_i32 = arith.constant 0 : i32
    %c0_i32_0 = arith.constant 0 : i32
    %c0_i32_1 = arith.constant 0 : i32
    return %c0_i32, %c0_i32_0 : i32, i32
  }
  func.func @transform_11(%arg0: i32) -> (i32, i32) {
    %c0_i32 = arith.constant 0 : i32
    %c0_i32_0 = arith.constant 0 : i32
    return %arg0, %c0_i32 : i32, i32
  }
}

module attributes {stable_mosaic.version = 11 : i64} {
  func.func @kernel(%arg0: i32, %arg1: memref<2x128xf32, #tpu.memory_space<vmem>>, %arg2: memref<2x128xf32, #tpu.memory_space<vmem>>, %arg3: memref<128x128xf32, #tpu.memory_space<vmem>>, %arg4: memref<1x128xf32, #tpu.memory_space<vmem>>, %arg5: memref<128x128xf32, #tpu.memory_space<vmem>>, %arg6: memref<128x128xf32, #tpu.memory_space<vmem>>, %arg7: memref<1x128xf32, #tpu.memory_space<vmem>>, %arg8: memref<128x128xf32, #tpu.memory_space<vmem>>, %arg9: memref<1x128xf32, #tpu.memory_space<vmem>>, %arg10: memref<128x128xf32, #tpu.memory_space<vmem>>, %arg11: memref<1x128xf32, #tpu.memory_space<vmem>>, %arg12: memref<2x128xf32, #tpu.memory_space<vmem>>) attributes {dimension_semantics = [#tpu.dimension_semantics<parallel>], iteration_bounds = array<i64: 1>, scalar_prefetch = 0 : i64, scratch_operands = 0 : i64, tpu.core_type = #tpu.core_type<tc>, window_params = [{transform_indices = @transform_0, window_bounds = array<i64: 2, 128>}, {transform_indices = @transform_1, window_bounds = array<i64: 2, 128>}, {pipeline_mode = #tpu.pipeline_mode<synchronous>, transform_indices = @transform_2, window_bounds = array<i64: 128, 128>}, {pipeline_mode = #tpu.pipeline_mode<synchronous>, transform_indices = @transform_3, window_bounds = array<i64: 1, 128>}, {pipeline_mode = #tpu.pipeline_mode<synchronous>, transform_indices = @transform_4, window_bounds = array<i64: 128, 128>}, {pipeline_mode = #tpu.pipeline_mode<synchronous>, transform_indices = @transform_5, window_bounds = array<i64: 128, 128>}, {pipeline_mode = #tpu.pipeline_mode<synchronous>, transform_indices = @transform_6, window_bounds = array<i64: 1, 128>}, {pipeline_mode = #tpu.pipeline_mode<synchronous>, transform_indices = @transform_7, window_bounds = array<i64: 128, 128>}, {pipeline_mode = #tpu.pipeline_mode<synchronous>, transform_indices = @transform_8, window_bounds = array<i64: 1, 128>}, {pipeline_mode = #tpu.pipeline_mode<synchronous>, transform_indices = @transform_9, window_bounds = array<i64: 128, 128>}, {pipeline_mode = #tpu.pipeline_mode<synchronous>, transform_indices = @transform_10, window_bounds = array<i64: 1, 128>}, {transform_indices = @transform_11, window_bounds = array<i64: 2, 128>}]} {
    %c0 = arith.constant 0 : index
    %c0_0 = arith.constant 0 : index
    %0 = vector.load %arg1[%c0, %c0_0] : memref<2x128xf32, #tpu.memory_space<vmem>>, vector<2x128xf32>
    %c0_1 = arith.constant 0 : index
    %c0_2 = arith.constant 0 : index
    %1 = vector.load %arg3[%c0_1, %c0_2] : memref<128x128xf32, #tpu.memory_space<vmem>>, vector<128x128xf32>
    %cst = arith.constant dense<0.000000e+00> : vector<2x128xf32>
    %2 = tpu.matmul %0, %1, %cst {dimension_numbers = #tpu.dot_dimension_numbers<[1], [0], [0], [1], [0, 0, 1, 1], [], []>} : vector<2x128xf32>, vector<128x128xf32>, vector<2x128xf32> -> vector<2x128xf32>
    %c0_3 = arith.constant 0 : index
    %c0_4 = arith.constant 0 : index
    %3 = vector.load %arg4[%c0_3, %c0_4] : memref<1x128xf32, #tpu.memory_space<vmem>>, vector<1x128xf32>
    %4 = vector.broadcast %3 : vector<1x128xf32> to vector<2x128xf32>
    %5 = arith.addf %2, %4 : vector<2x128xf32>
    %c0_5 = arith.constant 0 : index
    %c0_6 = arith.constant 0 : index
    %6 = vector.load %arg5[%c0_5, %c0_6] : memref<128x128xf32, #tpu.memory_space<vmem>>, vector<128x128xf32>
    %cst_7 = arith.constant dense<0.000000e+00> : vector<2x128xf32>
    %7 = tpu.matmul %5, %6, %cst_7 {dimension_numbers = #tpu.dot_dimension_numbers<[1], [0], [0], [1], [0, 0, 1, 1], [], []>} : vector<2x128xf32>, vector<128x128xf32>, vector<2x128xf32> -> vector<2x128xf32>
    %c0_8 = arith.constant 0 : index
    %c0_9 = arith.constant 0 : index
    %8 = vector.load %arg2[%c0_8, %c0_9] : memref<2x128xf32, #tpu.memory_space<vmem>>, vector<2x128xf32>
    %c0_10 = arith.constant 0 : index
    %c0_11 = arith.constant 0 : index
    %9 = vector.load %arg6[%c0_10, %c0_11] : memref<128x128xf32, #tpu.memory_space<vmem>>, vector<128x128xf32>
    %cst_12 = arith.constant dense<0.000000e+00> : vector<2x128xf32>
    %10 = tpu.matmul %8, %9, %cst_12 {dimension_numbers = #tpu.dot_dimension_numbers<[1], [0], [0], [1], [0, 0, 1, 1], [], []>} : vector<2x128xf32>, vector<128x128xf32>, vector<2x128xf32> -> vector<2x128xf32>
    %11 = arith.addf %7, %10 : vector<2x128xf32>
    %c0_13 = arith.constant 0 : index
    %c0_14 = arith.constant 0 : index
    %12 = vector.load %arg7[%c0_13, %c0_14] : memref<1x128xf32, #tpu.memory_space<vmem>>, vector<1x128xf32>
    %13 = vector.broadcast %12 : vector<1x128xf32> to vector<2x128xf32>
    %14 = arith.addf %11, %13 : vector<2x128xf32>
    %cst_15 = arith.constant 0.000000e+00 : f32
    %15 = vector.broadcast %cst_15 : f32 to vector<2x128xf32>
    %16 = arith.maximumf %14, %15 : vector<2x128xf32>
    %c0_16 = arith.constant 0 : index
    %c0_17 = arith.constant 0 : index
    %17 = vector.load %arg8[%c0_16, %c0_17] : memref<128x128xf32, #tpu.memory_space<vmem>>, vector<128x128xf32>
    %cst_18 = arith.constant dense<0.000000e+00> : vector<2x128xf32>
    %18 = tpu.matmul %16, %17, %cst_18 {dimension_numbers = #tpu.dot_dimension_numbers<[1], [0], [0], [1], [0, 0, 1, 1], [], []>} : vector<2x128xf32>, vector<128x128xf32>, vector<2x128xf32> -> vector<2x128xf32>
    %c0_19 = arith.constant 0 : index
    %c0_20 = arith.constant 0 : index
    %19 = vector.load %arg9[%c0_19, %c0_20] : memref<1x128xf32, #tpu.memory_space<vmem>>, vector<1x128xf32>
    %20 = vector.broadcast %19 : vector<1x128xf32> to vector<2x128xf32>
    %21 = arith.addf %18, %20 : vector<2x128xf32>
    %cst_21 = arith.constant 0.000000e+00 : f32
    %22 = vector.broadcast %cst_21 : f32 to vector<2x128xf32>
    %23 = arith.maximumf %21, %22 : vector<2x128xf32>
    %c0_22 = arith.constant 0 : index
    %c0_23 = arith.constant 0 : index
    %24 = vector.load %arg10[%c0_22, %c0_23] : memref<128x128xf32, #tpu.memory_space<vmem>>, vector<128x128xf32>
    %cst_24 = arith.constant dense<0.000000e+00> : vector<2x128xf32>
    %25 = tpu.matmul %23, %24, %cst_24 {dimension_numbers = #tpu.dot_dimension_numbers<[1], [0], [0], [1], [0, 0, 1, 1], [], []>} : vector<2x128xf32>, vector<128x128xf32>, vector<2x128xf32> -> vector<2x128xf32>
    %c0_25 = arith.constant 0 : index
    %c0_26 = arith.constant 0 : index
    %26 = vector.load %arg11[%c0_25, %c0_26] : memref<1x128xf32, #tpu.memory_space<vmem>>, vector<1x128xf32>
    %27 = vector.broadcast %26 : vector<1x128xf32> to vector<2x128xf32>
    %28 = arith.addf %25, %27 : vector<2x128xf32>
    %c0_27 = arith.constant 0 : index
    %c0_28 = arith.constant 0 : index
    %29 = vector.load %arg12[%c0_27, %c0_28] : memref<2x128xf32, #tpu.memory_space<vmem>>, vector<2x128xf32>
    tpu.vector_store %arg12[%c0_27, %c0_28], %28 {strides = array<i32>} : memref<2x128xf32, #tpu.memory_space<vmem>>, vector<2x128xf32>,
    return
  }
  func.func @transform_0(%arg0: i32) -> (i32, i32) {
    %c0_i32 = arith.constant 0 : i32
    %c0_i32_0 = arith.constant 0 : i32
    return %arg0, %c0_i32 : i32, i32
  }
  func.func @transform_1(%arg0: i32) -> (i32, i32) {
    %c0_i32 = arith.constant 0 : i32
    %c0_i32_0 = arith.constant 0 : i32
    return %arg0, %c0_i32 : i32, i32
  }
  func.func @transform_2(%arg0: i32) -> (i32, i32) {
    %c0_i32 = arith.constant 0 : i32
    %c0_i32_0 = arith.constant 0 : i32
    %c0_i32_1 = arith.constant 0 : i32
    return %c0_i32, %c0_i32_0 : i32, i32
  }
  func.func @transform_3(%arg0: i32) -> (i32, i32) {
    %c0_i32 = arith.constant 0 : i32
    %c0_i32_0 = arith.constant 0 : i32
    %c0_i32_1 = arith.constant 0 : i32
    return %c0_i32, %c0_i32_0 : i32, i32
  }
  func.func @transform_4(%arg0: i32) -> (i32, i32) {
    %c0_i32 = arith.constant 0 : i32
    %c0_i32_0 = arith.constant 0 : i32
    %c0_i32_1 = arith.constant 0 : i32
    return %c0_i32, %c0_i32_0 : i32, i32
  }
  func.func @transform_5(%arg0: i32) -> (i32, i32) {
    %c0_i32 = arith.constant 0 : i32
    %c0_i32_0 = arith.constant 0 : i32
    %c0_i32_1 = arith.constant 0 : i32
    return %c0_i32, %c0_i32_0 : i32, i32
  }
  func.func @transform_6(%arg0: i32) -> (i32, i32) {
    %c0_i32 = arith.constant 0 : i32
    %c0_i32_0 = arith.constant 0 : i32
    %c0_i32_1 = arith.constant 0 : i32
    return %c0_i32, %c0_i32_0 : i32, i32
  }
  func.func @transform_7(%arg0: i32) -> (i32, i32) {
    %c0_i32 = arith.constant 0 : i32
    %c0_i32_0 = arith.constant 0 : i32
    %c0_i32_1 = arith.constant 0 : i32
    return %c0_i32, %c0_i32_0 : i32, i32
  }
  func.func @transform_8(%arg0: i32) -> (i32, i32) {
    %c0_i32 = arith.constant 0 : i32
    %c0_i32_0 = arith.constant 0 : i32
    %c0_i32_1 = arith.constant 0 : i32
    return %c0_i32, %c0_i32_0 : i32, i32
  }
  func.func @transform_9(%arg0: i32) -> (i32, i32) {
    %c0_i32 = arith.constant 0 : i32
    %c0_i32_0 = arith.constant 0 : i32
    %c0_i32_1 = arith.constant 0 : i32
    return %c0_i32, %c0_i32_0 : i32, i32
  }
  func.func @transform_10(%arg0: i32) -> (i32, i32) {
    %c0_i32 = arith.constant 0 : i32
    %c0_i32_0 = arith.constant 0 : i32
    %c0_i32_1 = arith.constant 0 : i32
    return %c0_i32, %c0_i32_0 : i32, i32
  }
  func.func @transform_11(%arg0: i32) -> (i32, i32) {
    %c0_i32 = arith.constant 0 : i32
    %c0_i32_0 = arith.constant 0 : i32
    return %arg0, %c0_i32 : i32, i32
  }
}

</mosaic_0001>

<llo_original>
// kernel: tpu_custom_call.1
$region0: #{tpu_custom_call.1}
  #allocation0 [shape = 'u32[]', space=smem, size = 0x4, offset = 0x4, fixed_abs, tag = 'smem constant byte address 0x4 - core index']
  #allocation1 [shape = 'u32[144,128]{1,0:T(1,128)}', space=vmem, size = 0x12000, scoped, tag = 'internal scratch']
  %s0 = inlined_call_operand.hbm [shape: f32[2,128], index: 0, kind: input, shape index: {}]
  %s1 = inlined_call_operand.vmem [shape: f32[2,128], index: 1, kind: input, shape index: {}]
  %s2 = inlined_call_operand.hbm [shape: f32[128,128], index: 2, kind: input, shape index: {}]
  %s3 = inlined_call_operand.vmem [shape: f32[1,128], index: 3, kind: input, shape index: {}]
  %s4 = inlined_call_operand.hbm [shape: f32[128,128], index: 4, kind: input, shape index: {}]
  %s5 = inlined_call_operand.hbm [shape: f32[128,128], index: 5, kind: input, shape index: {}]
  %s6 = inlined_call_operand.vmem [shape: f32[1,128], index: 6, kind: input, shape index: {}]
  %s7 = inlined_call_operand.hbm [shape: f32[128,128], index: 7, kind: input, shape index: {}]
  %s8 = inlined_call_operand.vmem [shape: f32[1,128], index: 8, kind: input, shape index: {}]
  %s9 = inlined_call_operand.hbm [shape: f32[128,128], index: 9, kind: input, shape index: {}]
  %s10 = inlined_call_operand.vmem [shape: f32[1,128], index: 10, kind: input, shape index: {}]
  %s11 = inlined_call_operand.hbm [shape: f32[2,128], index: 11, kind: output, shape index: {}]
  %s12 = sld [smem:[#allocation0]]
  $region78: #{tpu_custom_call.1} parent=0
    _
  %s14 = ssub.s32 1, %s12
  %s15 = scalar_select 0, %s14, %s12
  $region1: #{tpu_custom_call.1} parent=0
    #allocation2 [shape = 'u8[1024]{0}', space=vmem, size = 0x400, scoped, tag = 'input window, operand 0, single buffered']
    #allocation3 [shape = 's32[1]{0}', space=sflag, size = 0x4, scoped, tag = 'scoped memory for tpu_custom_call.1']
    #allocation4 [shape = 's32[1]{0}', space=sflag, size = 0x4, scoped, tag = 'scoped memory for tpu_custom_call.1']
    #allocation5 [shape = 'u8[65536]{0}', space=vmem, size = 0x10000, scoped, tag = 'input window, operand 2, single buffered']
    #allocation6 [shape = 's32[1]{0}', space=sflag, size = 0x4, scoped, tag = 'scoped memory for tpu_custom_call.1']
    #allocation7 [shape = 'u8[65536]{0}', space=vmem, size = 0x10000, scoped, tag = 'input window, operand 4, single buffered']
    #allocation8 [shape = 'u8[65536]{0}', space=vmem, size = 0x10000, scoped, tag = 'input window, operand 5, single buffered']
    #allocation9 [shape = 's32[1]{0}', space=sflag, size = 0x4, scoped, tag = 'scoped memory for tpu_custom_call.1']
    #allocation10 [shape = 'u8[65536]{0}', space=vmem, size = 0x10000, scoped, tag = 'input window, operand 7, single buffered']
    #allocation11 [shape = 'u8[65536]{0}', space=vmem, size = 0x10000, scoped, tag = 'input window, operand 9, single buffered']
    #allocation12 [shape = 's32[1]{0}', space=sflag, size = 0x4, scoped, tag = 'scoped memory for tpu_custom_call.1']
    #allocation13 [shape = 'u8[1024]{0}', space=vmem, size = 0x400, scoped, tag = 'output window, operand 0, single buffered']
    %16 = vsyncpa [#allocation3], 0
    %17 = vsyncpa [#allocation6], 0
    %18 = vsyncpa [#allocation9], 0
    %19 = vsyncpa [#allocation12], 0
    %20 = vsyncpa [#allocation4], 0
    // Predicated region
    $region2: #{tpu_custom_call.1} parent=1 // pred_check
      _
    $region3: #{tpu_custom_call.1} parent=1 // pred_check_branch
      %22 = sbr.rel (0) target = $region5
    $region4: #{tpu_custom_call.1} parent=1 // pred_region
      %s24 = ssub.s32 32, 32
      %25 = vsyncadd [#allocation3], %s24
      %s27 = sshll.u32 [#allocation2], 4
      %s28 = int_to_ptr.vmem [resolvable:$true] %s27
      %30 = dma.hbm_to_vmem [thread:$0]  %s0, 32, %s28, [#allocation3]
    $region5: #{tpu_custom_call.1} parent=1 // pred_fallthru
      _
    // Predicated region
    $region6: #{tpu_custom_call.1} parent=1 // pred_check
      _
    $region7: #{tpu_custom_call.1} parent=1 // pred_check_branch
      %32 = sbr.rel (0) target = $region9
    $region8: #{tpu_custom_call.1} parent=1 // pred_region
      _
    $region9: #{tpu_custom_call.1} parent=1 // pred_fallthru
      _
    // Predicated region
    $region10: #{tpu_custom_call.1} parent=1 // pred_check
      _
    $region11: #{tpu_custom_call.1} parent=1 // pred_check_branch
      %34 = sbr.rel (0) target = $region13
    $region12: #{tpu_custom_call.1} parent=1 // pred_region
      %s36 = ssub.s32 2048, 2048
      %37 = vsyncadd [#allocation6], %s36
      %s38 = sshll.u32 [#allocation5], 4
      %s39 = int_to_ptr.vmem [resolvable:$true] %s38
      %44 = dma.hbm_to_vmem [thread:$0]  %s2, 2048, %s39, [#allocation6], 128, 128, 8
    $region13: #{tpu_custom_call.1} parent=1 // pred_fallthru
      _
    // Predicated region
    $region14: #{tpu_custom_call.1} parent=1 // pred_check
      _
    $region15: #{tpu_custom_call.1} parent=1 // pred_check_branch
      %46 = sbr.rel (0) target = $region17
    $region16: #{tpu_custom_call.1} parent=1 // pred_region
      _
    $region17: #{tpu_custom_call.1} parent=1 // pred_fallthru
      _
    // Predicated region
    $region18: #{tpu_custom_call.1} parent=1 // pred_check
      _
    $region19: #{tpu_custom_call.1} parent=1 // pred_check_branch
      %48 = sbr.rel (0) target = $region21
    $region20: #{tpu_custom_call.1} parent=1 // pred_region
      %s50 = ssub.s32 2048, 2048
      %51 = vsyncadd [#allocation6], %s50
      %s52 = sshll.u32 [#allocation7], 4
      %s53 = int_to_ptr.vmem [resolvable:$true] %s52
      %58 = dma.hbm_to_vmem [thread:$0]  %s4, 2048, %s53, [#allocation6], 128, 128, 8
    $region21: #{tpu_custom_call.1} parent=1 // pred_fallthru
      _
    // Predicated region
    $region22: #{tpu_custom_call.1} parent=1 // pred_check
      _
    $region23: #{tpu_custom_call.1} parent=1 // pred_check_branch
      %60 = sbr.rel (0) target = $region25
    $region24: #{tpu_custom_call.1} parent=1 // pred_region
      %s62 = ssub.s32 2048, 2048
      %63 = vsyncadd [#allocation9], %s62
      %s64 = sshll.u32 [#allocation8], 4
      %s65 = int_to_ptr.vmem [resolvable:$true] %s64
      %70 = dma.hbm_to_vmem [thread:$0]  %s5, 2048, %s65, [#allocation9], 128, 128, 8
    $region25: #{tpu_custom_call.1} parent=1 // pred_fallthru
      _
    // Predicated region
    $region26: #{tpu_custom_call.1} parent=1 // pred_check
      _
    $region27: #{tpu_custom_call.1} parent=1 // pred_check_branch
      %72 = sbr.rel (0) target = $region29
    $region28: #{tpu_custom_call.1} parent=1 // pred_region
      _
    $region29: #{tpu_custom_call.1} parent=1 // pred_fallthru
      _
    // Predicated region
    $region30: #{tpu_custom_call.1} parent=1 // pred_check
      _
    $region31: #{tpu_custom_call.1} parent=1 // pred_check_branch
      %74 = sbr.rel (0) target = $region33
    $region32: #{tpu_custom_call.1} parent=1 // pred_region
      %s76 = ssub.s32 2048, 2048
      %77 = vsyncadd [#allocation9], %s76
      %s78 = sshll.u32 [#allocation10], 4
      %s79 = int_to_ptr.vmem [resolvable:$true] %s78
      %84 = dma.hbm_to_vmem [thread:$0]  %s7, 2048, %s79, [#allocation9], 128, 128, 8
    $region33: #{tpu_custom_call.1} parent=1 // pred_fallthru
      _
    // Predicated region
    $region34: #{tpu_custom_call.1} parent=1 // pred_check
      _
    $region35: #{tpu_custom_call.1} parent=1 // pred_check_branch
      %86 = sbr.rel (0) target = $region37
    $region36: #{tpu_custom_call.1} parent=1 // pred_region
      _
    $region37: #{tpu_custom_call.1} parent=1 // pred_fallthru
      _
    // Predicated region
    $region38: #{tpu_custom_call.1} parent=1 // pred_check
      _
    $region39: #{tpu_custom_call.1} parent=1 // pred_check_branch
      %88 = sbr.rel (0) target = $region41
    $region40: #{tpu_custom_call.1} parent=1 // pred_region
      %s90 = ssub.s32 2048, 2048
      %91 = vsyncadd [#allocation12], %s90
      %s92 = sshll.u32 [#allocation11], 4
      %s93 = int_to_ptr.vmem [resolvable:$true] %s92
      %98 = dma.hbm_to_vmem [thread:$0]  %s9, 2048, %s93, [#allocation12], 128, 128, 8
    $region41: #{tpu_custom_call.1} parent=1 // pred_fallthru
      _
    // Predicated region
    $region42: #{tpu_custom_call.1} parent=1 // pred_check
      _
    $region43: #{tpu_custom_call.1} parent=1 // pred_check_branch
      %100 = sbr.rel (0) target = $region45
    $region44: #{tpu_custom_call.1} parent=1 // pred_region
      _
    $region45: #{tpu_custom_call.1} parent=1 // pred_fallthru
      _
    // Predicated region
    $region46: #{tpu_custom_call.1} parent=1 // pred_check
      _
    $region47: #{tpu_custom_call.1} parent=1 // pred_check_branch
      %102 = sbr.rel (0) target = $region49
    $region48: #{tpu_custom_call.1} parent=1 // pred_region
      %103 = dma.done [#allocation3], 32
    $region49: #{tpu_custom_call.1} parent=1 // pred_fallthru
      _
    // Predicated region
    $region50: #{tpu_custom_call.1} parent=1 // pred_check
      _
    $region51: #{tpu_custom_call.1} parent=1 // pred_check_branch
      %105 = sbr.rel (0) target = $region53
    $region52: #{tpu_custom_call.1} parent=1 // pred_region
      %106 = dma.done [#allocation6], 2048
    $region53: #{tpu_custom_call.1} parent=1 // pred_fallthru
      _
    // Predicated region
    $region54: #{tpu_custom_call.1} parent=1 // pred_check
      _
    $region55: #{tpu_custom_call.1} parent=1 // pred_check_branch
      %108 = sbr.rel (0) target = $region57
    $region56: #{tpu_custom_call.1} parent=1 // pred_region
      %109 = dma.done [#allocation6], 2048
    $region57: #{tpu_custom_call.1} parent=1 // pred_fallthru
      _
    // Predicated region
    $region58: #{tpu_custom_call.1} parent=1 // pred_check
      _
    $region59: #{tpu_custom_call.1} parent=1 // pred_check_branch
      %111 = sbr.rel (0) target = $region61
    $region60: #{tpu_custom_call.1} parent=1 // pred_region
      %112 = dma.done [#allocation9], 2048
    $region61: #{tpu_custom_call.1} parent=1 // pred_fallthru
      _
    // Predicated region
    $region62: #{tpu_custom_call.1} parent=1 // pred_check
      _
    $region63: #{tpu_custom_call.1} parent=1 // pred_check_branch
      %114 = sbr.rel (0) target = $region65
    $region64: #{tpu_custom_call.1} parent=1 // pred_region
      %115 = dma.done [#allocation9], 2048
    $region65: #{tpu_custom_call.1} parent=1 // pred_fallthru
      _
    // Predicated region
    $region66: #{tpu_custom_call.1} parent=1 // pred_check
      _
    $region67: #{tpu_custom_call.1} parent=1 // pred_check_branch
      %117 = sbr.rel (0) target = $region69
    $region68: #{tpu_custom_call.1} parent=1 // pred_region
      %118 = dma.done [#allocation12], 2048
    $region69: #{tpu_custom_call.1} parent=1 // pred_fallthru
      _
    %v119 = vld [vmem:[#allocation2] sm:$0x3]
    %v120 = vld [vmem:[#allocation5] sm:$0xff]
    %v121 = vld [vmem:[#allocation5 + $0x8] sm:$0xff]
    %v122 = vld [vmem:[#allocation5 + $0x10] sm:$0xff]
    %v123 = vld [vmem:[#allocation5 + $0x18] sm:$0xff]
    %v124 = vld [vmem:[#allocation5 + $0x20] sm:$0xff]
    %v125 = vld [vmem:[#allocation5 + $0x28] sm:$0xff]
    %v126 = vld [vmem:[#allocation5 + $0x30] sm:$0xff]
    %v127 = vld [vmem:[#allocation5 + $0x38] sm:$0xff]
    %v128 = vld [vmem:[#allocation5 + $0x40] sm:$0xff]
    %v129 = vld [vmem:[#allocation5 + $0x48] sm:$0xff]
    %v130 = vld [vmem:[#allocation5 + $0x50] sm:$0xff]
    %v131 = vld [vmem:[#allocation5 + $0x58] sm:$0xff]
    %v132 = vld [vmem:[#allocation5 + $0x60] sm:$0xff]
    %v133 = vld [vmem:[#allocation5 + $0x68] sm:$0xff]
    %v134 = vld [vmem:[#allocation5 + $0x70] sm:$0xff]
    %v135 = vld [vmem:[#allocation5 + $0x78] sm:$0xff]
    %v136 = vld [vmem:[%s3] sm:$0x1]
    %v138 = vlaneseq
    %v139 = vshrl.u32 %v138, 7
    %v140 = vsub.s32 0, %v139
    %v141 = vrot.slane %v136, %v140
    %143 = vmatprep.subr.mxu0 0.0
    %144 = vmatpush1.msra.mxu0 %v120
    %145 = vmatprep.subr.mxu0 0.0
    %146 = vmatpush1.msra.mxu0 %v121
    %147 = vmatprep.subr.mxu0 0.0
    %148 = vmatpush1.msra.mxu0 %v122
    %149 = vmatprep.subr.mxu0 0.0
    %150 = vmatpush1.msra.mxu0 %v123
    %151 = vmatprep.subr.mxu0 0.0
    %152 = vmatpush1.msra.mxu0 %v124
    %153 = vmatprep.subr.mxu0 0.0
    %154 = vmatpush1.msra.mxu0 %v125
    %155 = vmatprep.subr.mxu0 0.0
    %156 = vmatpush1.msra.mxu0 %v126
    %157 = vmatprep.subr.mxu0 0.0
    %158 = vmatpush1.msra.mxu0 %v127
    %159 = vmatprep.subr.mxu0 0.0
    %160 = vmatpush1.msra.mxu0 %v128
    %161 = vmatprep.subr.mxu0 0.0
    %162 = vmatpush1.msra.mxu0 %v129
    %163 = vmatprep.subr.mxu0 0.0
    %164 = vmatpush1.msra.mxu0 %v130
    %165 = vmatprep.subr.mxu0 0.0
    %166 = vmatpush1.msra.mxu0 %v131
    %167 = vmatprep.subr.mxu0 0.0
    %168 = vmatpush1.msra.mxu0 %v132
    %169 = vmatprep.subr.mxu0 0.0
    %170 = vmatpush1.msra.mxu0 %v133
    %171 = vmatprep.subr.mxu0 0.0
    %172 = vmatpush1.msra.mxu0 %v134
    %173 = vmatprep.subr.mxu0 0.0
    %174 = vmatpush1.msra.mxu0 %v135
    %175 = vmatprep.subr.mxu0 0.0
    %176 = vmatpush1.msra.mxu0 0.0
    %177 = vmatprep.subr.mxu0 0.0
    %178 = vmatpush1.msra.mxu0 0.0
    %179 = vmatprep.subr.mxu0 0.0
    %180 = vmatpush1.msra.mxu0 0.0
    %181 = vmatprep.subr.mxu0 0.0
    %182 = vmatpush1.msra.mxu0 0.0
    %183 = vmatprep.subr.mxu0 0.0
    %184 = vmatpush1.msra.mxu0 0.0
    %185 = vmatprep.subr.mxu0 0.0
    %186 = vmatpush1.msra.mxu0 0.0
    %187 = vmatprep.subr.mxu0 0.0
    %188 = vmatpush1.msra.mxu0 0.0
    %189 = vmatprep.subr.mxu0 0.0
    %190 = vmatpush1.msra.mxu0 0.0
    %191 = vmatprep.subr.mxu0 0.0
    %192 = vmatpush1.msra.mxu0 0.0
    %193 = vmatprep.subr.mxu0 0.0
    %194 = vmatpush1.msra.mxu0 0.0
    %195 = vmatprep.subr.mxu0 0.0
    %196 = vmatpush1.msra.mxu0 0.0
    %197 = vmatprep.subr.mxu0 0.0
    %198 = vmatpush1.msra.mxu0 0.0
    %199 = vmatprep.subr.mxu0 0.0
    %200 = vmatpush1.msra.mxu0 0.0
    %201 = vmatprep.subr.mxu0 0.0
    %202 = vmatpush1.msra.mxu0 0.0
    %203 = vmatprep.subr.mxu0 0.0
    %204 = vmatpush1.msra.mxu0 0.0
    %205 = vmatprep.subr.mxu0 0.0
    %206 = vmatpush1.msra.mxu0 0.0
    %207 = vmatprep.mubr.f32.mxu0 0.0
    %208 = vmatmul.mubr.f32.gmra.mrb[0].mxu0 %v119
    %v209 = vpop.f32.mrb[0].mxu0
    %v210 = vadd.f32 %v141, %v209
    %v211 = vpop.f32.mrb[0].mxu0
    %212 = vdwg.mxu0
    %v213 = vld [vmem:[#allocation7] sm:$0xff]
    %v214 = vld [vmem:[#allocation7 + $0x8] sm:$0xff]
    %v215 = vld [vmem:[#allocation7 + $0x10] sm:$0xff]
    %v216 = vld [vmem:[#allocation7 + $0x18] sm:$0xff]
    %v217 = vld [vmem:[#allocation7 + $0x20] sm:$0xff]
    %v218 = vld [vmem:[#allocation7 + $0x28] sm:$0xff]
    %v219 = vld [vmem:[#allocation7 + $0x30] sm:$0xff]
    %v220 = vld [vmem:[#allocation7 + $0x38] sm:$0xff]
    %v221 = vld [vmem:[#allocation7 + $0x40] sm:$0xff]
    %v222 = vld [vmem:[#allocation7 + $0x48] sm:$0xff]
    %v223 = vld [vmem:[#allocation7 + $0x50] sm:$0xff]
    %v224 = vld [vmem:[#allocation7 + $0x58] sm:$0xff]
    %v225 = vld [vmem:[#allocation7 + $0x60] sm:$0xff]
    %v226 = vld [vmem:[#allocation7 + $0x68] sm:$0xff]
    %v227 = vld [vmem:[#allocation7 + $0x70] sm:$0xff]
    %v228 = vld [vmem:[#allocation7 + $0x78] sm:$0xff]
    %v229 = vld [vmem:[%s1] sm:$0x3]
    %v230 = vld [vmem:[#allocation8] sm:$0xff]
    %v231 = vld [vmem:[#allocation8 + $0x8] sm:$0xff]
    %v232 = vld [vmem:[#allocation8 + $0x10] sm:$0xff]
    %v233 = vld [vmem:[#allocation8 + $0x18] sm:$0xff]
    %v234 = vld [vmem:[#allocation8 + $0x20] sm:$0xff]
    %v235 = vld [vmem:[#allocation8 + $0x28] sm:$0xff]
    %v236 = vld [vmem:[#allocation8 + $0x30] sm:$0xff]
    %v237 = vld [vmem:[#allocation8 + $0x38] sm:$0xff]
    %v238 = vld [vmem:[#allocation8 + $0x40] sm:$0xff]
    %v239 = vld [vmem:[#allocation8 + $0x48] sm:$0xff]
    %v240 = vld [vmem:[#allocation8 + $0x50] sm:$0xff]
    %v241 = vld [vmem:[#allocation8 + $0x58] sm:$0xff]
    %v242 = vld [vmem:[#allocation8 + $0x60] sm:$0xff]
    %v243 = vld [vmem:[#allocation8 + $0x68] sm:$0xff]
    %v244 = vld [vmem:[#allocation8 + $0x70] sm:$0xff]
    %v245 = vld [vmem:[#allocation8 + $0x78] sm:$0xff]
    %246 = vmatprep.subr.mxu0 0.0
    %247 = vmatpush1.msra.mxu0 %v230
    %248 = vmatprep.subr.mxu0 0.0
    %249 = vmatpush1.msra.mxu0 %v231
    %250 = vmatprep.subr.mxu0 0.0
    %251 = vmatpush1.msra.mxu0 %v232
    %252 = vmatprep.subr.mxu0 0.0
    %253 = vmatpush1.msra.mxu0 %v233
    %254 = vmatprep.subr.mxu0 0.0
    %255 = vmatpush1.msra.mxu0 %v234
    %256 = vmatprep.subr.mxu0 0.0
    %257 = vmatpush1.msra.mxu0 %v235
    %258 = vmatprep.subr.mxu0 0.0
    %259 = vmatpush1.msra.mxu0 %v236
    %260 = vmatprep.subr.mxu0 0.0
    %261 = vmatpush1.msra.mxu0 %v237
    %262 = vmatprep.subr.mxu0 0.0
    %263 = vmatpush1.msra.mxu0 %v238
    %264 = vmatprep.subr.mxu0 0.0
    %265 = vmatpush1.msra.mxu0 %v239
    %266 = vmatprep.subr.mxu0 0.0
    %267 = vmatpush1.msra.mxu0 %v240
    %268 = vmatprep.subr.mxu0 0.0
    %269 = vmatpush1.msra.mxu0 %v241
    %270 = vmatprep.subr.mxu0 0.0
    %271 = vmatpush1.msra.mxu0 %v242
    %272 = vmatprep.subr.mxu0 0.0
    %273 = vmatpush1.msra.mxu0 %v243
    %274 = vmatprep.subr.mxu0 0.0
    %275 = vmatpush1.msra.mxu0 %v244
    %276 = vmatprep.subr.mxu0 0.0
    %277 = vmatpush1.msra.mxu0 %v245
    %278 = vmatprep.subr.mxu0 0.0
    %279 = vmatpush1.msra.mxu0 0.0
    %280 = vmatprep.subr.mxu0 0.0
    %281 = vmatpush1.msra.mxu0 0.0
    %282 = vmatprep.subr.mxu0 0.0
    %283 = vmatpush1.msra.mxu0 0.0
    %284 = vmatprep.subr.mxu0 0.0
    %285 = vmatpush1.msra.mxu0 0.0
    %286 = vmatprep.subr.mxu0 0.0
    %287 = vmatpush1.msra.mxu0 0.0
    %288 = vmatprep.subr.mxu0 0.0
    %289 = vmatpush1.msra.mxu0 0.0
    %290 = vmatprep.subr.mxu0 0.0
    %291 = vmatpush1.msra.mxu0 0.0
    %292 = vmatprep.subr.mxu0 0.0
    %293 = vmatpush1.msra.mxu0 0.0
    %294 = vmatprep.subr.mxu0 0.0
    %295 = vmatpush1.msra.mxu0 0.0
    %296 = vmatprep.subr.mxu0 0.0
    %297 = vmatpush1.msra.mxu0 0.0
    %298 = vmatprep.subr.mxu0 0.0
    %299 = vmatpush1.msra.mxu0 0.0
    %300 = vmatprep.subr.mxu0 0.0
    %301 = vmatpush1.msra.mxu0 0.0
    %302 = vmatprep.subr.mxu0 0.0
    %303 = vmatpush1.msra.mxu0 0.0
    %304 = vmatprep.subr.mxu0 0.0
    %305 = vmatpush1.msra.mxu0 0.0
    %306 = vmatprep.subr.mxu0 0.0
    %307 = vmatpush1.msra.mxu0 0.0
    %308 = vmatprep.subr.mxu0 0.0
    %309 = vmatpush1.msra.mxu0 0.0
    %310 = vmatprep.mubr.f32.mxu0 0.0
    %311 = vmatmul.mubr.f32.gmra.mrb[0].mxu0 %v229
    %v312 = vpop.f32.mrb[0].mxu0
    %v313 = vadd.f32 0.0, %v312
    %v314 = vpop.f32.mrb[0].mxu0
    %315 = vdwg.mxu0
    %316 = vmatprep.subr.mxu0 0.0
    %317 = vmatpush1.msra.mxu0 %v213
    %318 = vmatprep.subr.mxu0 0.0
    %319 = vmatpush1.msra.mxu0 %v214
    %320 = vmatprep.subr.mxu0 0.0
    %321 = vmatpush1.msra.mxu0 %v215
    %322 = vmatprep.subr.mxu0 0.0
    %323 = vmatpush1.msra.mxu0 %v216
    %324 = vmatprep.subr.mxu0 0.0
    %325 = vmatpush1.msra.mxu0 %v217
    %326 = vmatprep.subr.mxu0 0.0
    %327 = vmatpush1.msra.mxu0 %v218
    %328 = vmatprep.subr.mxu0 0.0
    %329 = vmatpush1.msra.mxu0 %v219
    %330 = vmatprep.subr.mxu0 0.0
    %331 = vmatpush1.msra.mxu0 %v220
    %332 = vmatprep.subr.mxu0 0.0
    %333 = vmatpush1.msra.mxu0 %v221
    %334 = vmatprep.subr.mxu0 0.0
    %335 = vmatpush1.msra.mxu0 %v222
    %336 = vmatprep.subr.mxu0 0.0
    %337 = vmatpush1.msra.mxu0 %v223
    %338 = vmatprep.subr.mxu0 0.0
    %339 = vmatpush1.msra.mxu0 %v224
    %340 = vmatprep.subr.mxu0 0.0
    %341 = vmatpush1.msra.mxu0 %v225
    %342 = vmatprep.subr.mxu0 0.0
    %343 = vmatpush1.msra.mxu0 %v226
    %344 = vmatprep.subr.mxu0 0.0
    %345 = vmatpush1.msra.mxu0 %v227
    %346 = vmatprep.subr.mxu0 0.0
    %347 = vmatpush1.msra.mxu0 %v228
    %348 = vmatprep.subr.mxu0 0.0
    %349 = vmatpush1.msra.mxu0 0.0
    %350 = vmatprep.subr.mxu0 0.0
    %351 = vmatpush1.msra.mxu0 0.0
    %352 = vmatprep.subr.mxu0 0.0
    %353 = vmatpush1.msra.mxu0 0.0
    %354 = vmatprep.subr.mxu0 0.0
    %355 = vmatpush1.msra.mxu0 0.0
    %356 = vmatprep.subr.mxu0 0.0
    %357 = vmatpush1.msra.mxu0 0.0
    %358 = vmatprep.subr.mxu0 0.0
    %359 = vmatpush1.msra.mxu0 0.0
    %360 = vmatprep.subr.mxu0 0.0
    %361 = vmatpush1.msra.mxu0 0.0
    %362 = vmatprep.subr.mxu0 0.0
    %363 = vmatpush1.msra.mxu0 0.0
    %364 = vmatprep.subr.mxu0 0.0
    %365 = vmatpush1.msra.mxu0 0.0
    %366 = vmatprep.subr.mxu0 0.0
    %367 = vmatpush1.msra.mxu0 0.0
    %368 = vmatprep.subr.mxu0 0.0
    %369 = vmatpush1.msra.mxu0 0.0
    %370 = vmatprep.subr.mxu0 0.0
    %371 = vmatpush1.msra.mxu0 0.0
    %372 = vmatprep.subr.mxu0 0.0
    %373 = vmatpush1.msra.mxu0 0.0
    %374 = vmatprep.subr.mxu0 0.0
    %375 = vmatpush1.msra.mxu0 0.0
    %376 = vmatprep.subr.mxu0 0.0
    %377 = vmatpush1.msra.mxu0 0.0
    %378 = vmatprep.subr.mxu0 0.0
    %379 = vmatpush1.msra.mxu0 0.0
    %380 = vmatprep.mubr.f32.mxu0 0.0
    %381 = vmatmul.mubr.f32.gmra.mrb[0].mxu0 %v210
    %v382 = vpop.f32.mrb[0].mxu0
    %v383 = vadd.f32 %v313, %v382
    %v384 = vpop.f32.mrb[0].mxu0
    %385 = vdwg.mxu0
    %v386 = vld [vmem:[%s6] sm:$0x1]
    %v388 = vlaneseq
    %v389 = vshrl.u32 %v388, 7
    %v390 = vsub.s32 0, %v389
    %v391 = vrot.slane %v386, %v390
    %v393 = vadd.f32 %v383, %v391
    %v394 = vmax.f32 %v393, 0.0
    %v395 = vld [vmem:[#allocation10] sm:$0xff]
    %v396 = vld [vmem:[#allocation10 + $0x8] sm:$0xff]
    %v397 = vld [vmem:[#allocation10 + $0x10] sm:$0xff]
    %v398 = vld [vmem:[#allocation10 + $0x18] sm:$0xff]
    %v399 = vld [vmem:[#allocation10 + $0x20] sm:$0xff]
    %v400 = vld [vmem:[#allocation10 + $0x28] sm:$0xff]
    %v401 = vld [vmem:[#allocation10 + $0x30] sm:$0xff]
    %v402 = vld [vmem:[#allocation10 + $0x38] sm:$0xff]
    %v403 = vld [vmem:[#allocation10 + $0x40] sm:$0xff]
    %v404 = vld [vmem:[#allocation10 + $0x48] sm:$0xff]
    %v405 = vld [vmem:[#allocation10 + $0x50] sm:$0xff]
    %v406 = vld [vmem:[#allocation10 + $0x58] sm:$0xff]
    %v407 = vld [vmem:[#allocation10 + $0x60] sm:$0xff]
    %v408 = vld [vmem:[#allocation10 + $0x68] sm:$0xff]
    %v409 = vld [vmem:[#allocation10 + $0x70] sm:$0xff]
    %v410 = vld [vmem:[#allocation10 + $0x78] sm:$0xff]
    %v411 = vld [vmem:[%s8] sm:$0x1]
    %v413 = vlaneseq
    %v414 = vshrl.u32 %v413, 7
    %v415 = vsub.s32 0, %v414
    %v416 = vrot.slane %v411, %v415
    %418 = vmatprep.subr.mxu0 0.0
    %419 = vmatpush1.msra.mxu0 %v395
    %420 = vmatprep.subr.mxu0 0.0
    %421 = vmatpush1.msra.mxu0 %v396
    %422 = vmatprep.subr.mxu0 0.0
    %423 = vmatpush1.msra.mxu0 %v397
    %424 = vmatprep.subr.mxu0 0.0
    %425 = vmatpush1.msra.mxu0 %v398
    %426 = vmatprep.subr.mxu0 0.0
    %427 = vmatpush1.msra.mxu0 %v399
    %428 = vmatprep.subr.mxu0 0.0
    %429 = vmatpush1.msra.mxu0 %v400
    %430 = vmatprep.subr.mxu0 0.0
    %431 = vmatpush1.msra.mxu0 %v401
    %432 = vmatprep.subr.mxu0 0.0
    %433 = vmatpush1.msra.mxu0 %v402
    %434 = vmatprep.subr.mxu0 0.0
    %435 = vmatpush1.msra.mxu0 %v403
    %436 = vmatprep.subr.mxu0 0.0
    %437 = vmatpush1.msra.mxu0 %v404
    %438 = vmatprep.subr.mxu0 0.0
    %439 = vmatpush1.msra.mxu0 %v405
    %440 = vmatprep.subr.mxu0 0.0
    %441 = vmatpush1.msra.mxu0 %v406
    %442 = vmatprep.subr.mxu0 0.0
    %443 = vmatpush1.msra.mxu0 %v407
    %444 = vmatprep.subr.mxu0 0.0
    %445 = vmatpush1.msra.mxu0 %v408
    %446 = vmatprep.subr.mxu0 0.0
    %447 = vmatpush1.msra.mxu0 %v409
    %448 = vmatprep.subr.mxu0 0.0
    %449 = vmatpush1.msra.mxu0 %v410
    %450 = vmatprep.subr.mxu0 0.0
    %451 = vmatpush1.msra.mxu0 0.0
    %452 = vmatprep.subr.mxu0 0.0
    %453 = vmatpush1.msra.mxu0 0.0
    %454 = vmatprep.subr.mxu0 0.0
    %455 = vmatpush1.msra.mxu0 0.0
    %456 = vmatprep.subr.mxu0 0.0
    %457 = vmatpush1.msra.mxu0 0.0
    %458 = vmatprep.subr.mxu0 0.0
    %459 = vmatpush1.msra.mxu0 0.0
    %460 = vmatprep.subr.mxu0 0.0
    %461 = vmatpush1.msra.mxu0 0.0
    %462 = vmatprep.subr.mxu0 0.0
    %463 = vmatpush1.msra.mxu0 0.0
    %464 = vmatprep.subr.mxu0 0.0
    %465 = vmatpush1.msra.mxu0 0.0
    %466 = vmatprep.subr.mxu0 0.0
    %467 = vmatpush1.msra.mxu0 0.0
    %468 = vmatprep.subr.mxu0 0.0
    %469 = vmatpush1.msra.mxu0 0.0
    %470 = vmatprep.subr.mxu0 0.0
    %471 = vmatpush1.msra.mxu0 0.0
    %472 = vmatprep.subr.mxu0 0.0
    %473 = vmatpush1.msra.mxu0 0.0
    %474 = vmatprep.subr.mxu0 0.0
    %475 = vmatpush1.msra.mxu0 0.0
    %476 = vmatprep.subr.mxu0 0.0
    %477 = vmatpush1.msra.mxu0 0.0
    %478 = vmatprep.subr.mxu0 0.0
    %479 = vmatpush1.msra.mxu0 0.0
    %480 = vmatprep.subr.mxu0 0.0
    %481 = vmatpush1.msra.mxu0 0.0
    %482 = vmatprep.mubr.f32.mxu0 0.0
    %483 = vmatmul.mubr.f32.gmra.mrb[0].mxu0 %v394
    %v484 = vpop.f32.mrb[0].mxu0
    %v485 = vadd.f32 %v416, %v484
    %v486 = vpop.f32.mrb[0].mxu0
    %487 = vdwg.mxu0
    %v488 = vmax.f32 %v485, 0.0
    %v489 = vld [vmem:[#allocation11] sm:$0xff]
    %v490 = vld [vmem:[#allocation11 + $0x8] sm:$0xff]
    %v491 = vld [vmem:[#allocation11 + $0x10] sm:$0xff]
    %v492 = vld [vmem:[#allocation11 + $0x18] sm:$0xff]
    %v493 = vld [vmem:[#allocation11 + $0x20] sm:$0xff]
    %v494 = vld [vmem:[#allocation11 + $0x28] sm:$0xff]
    %v495 = vld [vmem:[#allocation11 + $0x30] sm:$0xff]
    %v496 = vld [vmem:[#allocation11 + $0x38] sm:$0xff]
    %v497 = vld [vmem:[#allocation11 + $0x40] sm:$0xff]
    %v498 = vld [vmem:[#allocation11 + $0x48] sm:$0xff]
    %v499 = vld [vmem:[#allocation11 + $0x50] sm:$0xff]
    %v500 = vld [vmem:[#allocation11 + $0x58] sm:$0xff]
    %v501 = vld [vmem:[#allocation11 + $0x60] sm:$0xff]
    %v502 = vld [vmem:[#allocation11 + $0x68] sm:$0xff]
    %v503 = vld [vmem:[#allocation11 + $0x70] sm:$0xff]
    %v504 = vld [vmem:[#allocation11 + $0x78] sm:$0xff]
    %v505 = vld [vmem:[%s10] sm:$0x1]
    %v507 = vlaneseq
    %v508 = vshrl.u32 %v507, 7
    %v509 = vsub.s32 0, %v508
    %v510 = vrot.slane %v505, %v509
    %512 = vmatprep.subr.mxu0 0.0
    %513 = vmatpush1.msra.mxu0 %v489
    %514 = vmatprep.subr.mxu0 0.0
    %515 = vmatpush1.msra.mxu0 %v490
    %516 = vmatprep.subr.mxu0 0.0
    %517 = vmatpush1.msra.mxu0 %v491
    %518 = vmatprep.subr.mxu0 0.0
    %519 = vmatpush1.msra.mxu0 %v492
    %520 = vmatprep.subr.mxu0 0.0
    %521 = vmatpush1.msra.mxu0 %v493
    %522 = vmatprep.subr.mxu0 0.0
    %523 = vmatpush1.msra.mxu0 %v494
    %524 = vmatprep.subr.mxu0 0.0
    %525 = vmatpush1.msra.mxu0 %v495
    %526 = vmatprep.subr.mxu0 0.0
    %527 = vmatpush1.msra.mxu0 %v496
    %528 = vmatprep.subr.mxu0 0.0
    %529 = vmatpush1.msra.mxu0 %v497
    %530 = vmatprep.subr.mxu0 0.0
    %531 = vmatpush1.msra.mxu0 %v498
    %532 = vmatprep.subr.mxu0 0.0
    %533 = vmatpush1.msra.mxu0 %v499
    %534 = vmatprep.subr.mxu0 0.0
    %535 = vmatpush1.msra.mxu0 %v500
    %536 = vmatprep.subr.mxu0 0.0
    %537 = vmatpush1.msra.mxu0 %v501
    %538 = vmatprep.subr.mxu0 0.0
    %539 = vmatpush1.msra.mxu0 %v502
    %540 = vmatprep.subr.mxu0 0.0
    %541 = vmatpush1.msra.mxu0 %v503
    %542 = vmatprep.subr.mxu0 0.0
    %543 = vmatpush1.msra.mxu0 %v504
    %544 = vmatprep.subr.mxu0 0.0
    %545 = vmatpush1.msra.mxu0 0.0
    %546 = vmatprep.subr.mxu0 0.0
    %547 = vmatpush1.msra.mxu0 0.0
    %548 = vmatprep.subr.mxu0 0.0
    %549 = vmatpush1.msra.mxu0 0.0
    %550 = vmatprep.subr.mxu0 0.0
    %551 = vmatpush1.msra.mxu0 0.0
    %552 = vmatprep.subr.mxu0 0.0
    %553 = vmatpush1.msra.mxu0 0.0
    %554 = vmatprep.subr.mxu0 0.0
    %555 = vmatpush1.msra.mxu0 0.0
    %556 = vmatprep.subr.mxu0 0.0
    %557 = vmatpush1.msra.mxu0 0.0
    %558 = vmatprep.subr.mxu0 0.0
    %559 = vmatpush1.msra.mxu0 0.0
    %560 = vmatprep.subr.mxu0 0.0
    %561 = vmatpush1.msra.mxu0 0.0
    %562 = vmatprep.subr.mxu0 0.0
    %563 = vmatpush1.msra.mxu0 0.0
    %564 = vmatprep.subr.mxu0 0.0
    %565 = vmatpush1.msra.mxu0 0.0
    %566 = vmatprep.subr.mxu0 0.0
    %567 = vmatpush1.msra.mxu0 0.0
    %568 = vmatprep.subr.mxu0 0.0
    %569 = vmatpush1.msra.mxu0 0.0
    %570 = vmatprep.subr.mxu0 0.0
    %571 = vmatpush1.msra.mxu0 0.0
    %572 = vmatprep.subr.mxu0 0.0
    %573 = vmatpush1.msra.mxu0 0.0
    %574 = vmatprep.subr.mxu0 0.0
    %575 = vmatpush1.msra.mxu0 0.0
    %576 = vmatprep.mubr.f32.mxu0 0.0
    %577 = vmatmul.mubr.f32.gmra.mrb[0].mxu0 %v488
    %v578 = vpop.f32.mrb[0].mxu0
    %v579 = vadd.f32 %v510, %v578
    %v580 = vpop.f32.mrb[0].mxu0
    %581 = vdwg.mxu0
    %582 = vst [vmem:[#allocation13] sm:$0x3] %v579
    // Predicated region
    $region70: #{tpu_custom_call.1} parent=1 // pred_check
      _
    $region71: #{tpu_custom_call.1} parent=1 // pred_check_branch
      %584 = sbr.rel (0) target = $region73
    $region72: #{tpu_custom_call.1} parent=1 // pred_region
      %s586 = ssub.s32 32, 32
      %587 = vsyncadd [#allocation4], %s586
      %s589 = sshll.u32 [#allocation13], 4
      %s590 = int_to_ptr.vmem [resolvable:$true] %s589
      %592 = dma.vmem_to_hbm [thread:$0]  %s590, 32, %s11, [#allocation4]
    $region73: #{tpu_custom_call.1} parent=1 // pred_fallthru
      _
    // Predicated region
    $region74: #{tpu_custom_call.1} parent=1 // pred_check
      _
    $region75: #{tpu_custom_call.1} parent=1 // pred_check_branch
      %594 = sbr.rel (0) target = $region77
    $region76: #{tpu_custom_call.1} parent=1 // pred_region
      %595 = dma.done [#allocation4], 32
    $region77: #{tpu_custom_call.1} parent=1 // pred_fallthru
      _
    %596 = vsyncpa [#allocation3], 1
    %597 = vsyncpa [#allocation6], 1
    %598 = vsyncpa [#allocation9], 1
    %599 = vsyncpa [#allocation12], 1
    %600 = vsyncpa [#allocation4], 1

// kernel: tpu_custom_call.1
$region0: #{tpu_custom_call.1}
  #allocation0 [shape = 'u32[]', space=smem, size = 0x4, offset = 0x4, fixed_abs, tag = 'smem constant byte address 0x4 - core index']
  #allocation1 [shape = 'u32[144,128]{1,0:T(1,128)}', space=vmem, size = 0x12000, scoped, tag = 'internal scratch']
  %s0 = inlined_call_operand.hbm [shape: f32[2,128], index: 0, kind: input, shape index: {}]
  %s1 = inlined_call_operand.vmem [shape: f32[2,128], index: 1, kind: input, shape index: {}]
  %s2 = inlined_call_operand.hbm [shape: f32[128,128], index: 2, kind: input, shape index: {}]
  %s3 = inlined_call_operand.vmem [shape: f32[1,128], index: 3, kind: input, shape index: {}]
  %s4 = inlined_call_operand.hbm [shape: f32[128,128], index: 4, kind: input, shape index: {}]
  %s5 = inlined_call_operand.hbm [shape: f32[128,128], index: 5, kind: input, shape index: {}]
  %s6 = inlined_call_operand.vmem [shape: f32[1,128], index: 6, kind: input, shape index: {}]
  %s7 = inlined_call_operand.hbm [shape: f32[128,128], index: 7, kind: input, shape index: {}]
  %s8 = inlined_call_operand.vmem [shape: f32[1,128], index: 8, kind: input, shape index: {}]
  %s9 = inlined_call_operand.hbm [shape: f32[128,128], index: 9, kind: input, shape index: {}]
  %s10 = inlined_call_operand.vmem [shape: f32[1,128], index: 10, kind: input, shape index: {}]
  %s11 = inlined_call_operand.hbm [shape: f32[2,128], index: 11, kind: output, shape index: {}]
  %s12 = sld [smem:[#allocation0]]
  $region78: #{tpu_custom_call.1} parent=0
    _
  %s14 = ssub.s32 1, %s12
  %s15 = scalar_select 0, %s14, %s12
  $region1: #{tpu_custom_call.1} parent=0
    #allocation2 [shape = 'u8[1024]{0}', space=vmem, size = 0x400, scoped, tag = 'input window, operand 0, single buffered']
    #allocation3 [shape = 's32[1]{0}', space=sflag, size = 0x4, scoped, tag = 'scoped memory for tpu_custom_call.1']
    #allocation4 [shape = 's32[1]{0}', space=sflag, size = 0x4, scoped, tag = 'scoped memory for tpu_custom_call.1']
    #allocation5 [shape = 'u8[65536]{0}', space=vmem, size = 0x10000, scoped, tag = 'input window, operand 2, single buffered']
    #allocation6 [shape = 's32[1]{0}', space=sflag, size = 0x4, scoped, tag = 'scoped memory for tpu_custom_call.1']
    #allocation7 [shape = 'u8[65536]{0}', space=vmem, size = 0x10000, scoped, tag = 'input window, operand 4, single buffered']
    #allocation8 [shape = 'u8[65536]{0}', space=vmem, size = 0x10000, scoped, tag = 'input window, operand 5, single buffered']
    #allocation9 [shape = 's32[1]{0}', space=sflag, size = 0x4, scoped, tag = 'scoped memory for tpu_custom_call.1']
    #allocation10 [shape = 'u8[65536]{0}', space=vmem, size = 0x10000, scoped, tag = 'input window, operand 7, single buffered']
    #allocation11 [shape = 'u8[65536]{0}', space=vmem, size = 0x10000, scoped, tag = 'input window, operand 9, single buffered']
    #allocation12 [shape = 's32[1]{0}', space=sflag, size = 0x4, scoped, tag = 'scoped memory for tpu_custom_call.1']
    #allocation13 [shape = 'u8[1024]{0}', space=vmem, size = 0x400, scoped, tag = 'output window, operand 0, single buffered']
    %16 = vsyncpa [#allocation3], 0
    %17 = vsyncpa [#allocation6], 0
    %18 = vsyncpa [#allocation9], 0
    %19 = vsyncpa [#allocation12], 0
    %20 = vsyncpa [#allocation4], 0
    // Predicated region
    $region2: #{tpu_custom_call.1} parent=1 // pred_check
      _
    $region3: #{tpu_custom_call.1} parent=1 // pred_check_branch
      %22 = sbr.rel (0) target = $region5
    $region4: #{tpu_custom_call.1} parent=1 // pred_region
      %s24 = ssub.s32 32, 32
      %25 = vsyncadd [#allocation3], %s24
      %s27 = sshll.u32 [#allocation2], 4
      %s28 = int_to_ptr.vmem [resolvable:$true] %s27
      %30 = dma.hbm_to_vmem [thread:$0]  %s0, 32, %s28, [#allocation3]
    $region5: #{tpu_custom_call.1} parent=1 // pred_fallthru
      _
    // Predicated region
    $region6: #{tpu_custom_call.1} parent=1 // pred_check
      _
    $region7: #{tpu_custom_call.1} parent=1 // pred_check_branch
      %32 = sbr.rel (0) target = $region9
    $region8: #{tpu_custom_call.1} parent=1 // pred_region
      _
    $region9: #{tpu_custom_call.1} parent=1 // pred_fallthru
      _
    // Predicated region
    $region10: #{tpu_custom_call.1} parent=1 // pred_check
      _
    $region11: #{tpu_custom_call.1} parent=1 // pred_check_branch
      %34 = sbr.rel (0) target = $region13
    $region12: #{tpu_custom_call.1} parent=1 // pred_region
      %s36 = ssub.s32 2048, 2048
      %37 = vsyncadd [#allocation6], %s36
      %s38 = sshll.u32 [#allocation5], 4
      %s39 = int_to_ptr.vmem [resolvable:$true] %s38
      %44 = dma.hbm_to_vmem [thread:$0]  %s2, 2048, %s39, [#allocation6], 128, 128, 8
    $region13: #{tpu_custom_call.1} parent=1 // pred_fallthru
      _
    // Predicated region
    $region14: #{tpu_custom_call.1} parent=1 // pred_check
      _
    $region15: #{tpu_custom_call.1} parent=1 // pred_check_branch
      %46 = sbr.rel (0) target = $region17
    $region16: #{tpu_custom_call.1} parent=1 // pred_region
      _
    $region17: #{tpu_custom_call.1} parent=1 // pred_fallthru
      _
    // Predicated region
    $region18: #{tpu_custom_call.1} parent=1 // pred_check
      _
    $region19: #{tpu_custom_call.1} parent=1 // pred_check_branch
      %48 = sbr.rel (0) target = $region21
    $region20: #{tpu_custom_call.1} parent=1 // pred_region
      %s50 = ssub.s32 2048, 2048
      %51 = vsyncadd [#allocation6], %s50
      %s52 = sshll.u32 [#allocation7], 4
      %s53 = int_to_ptr.vmem [resolvable:$true] %s52
      %58 = dma.hbm_to_vmem [thread:$0]  %s4, 2048, %s53, [#allocation6], 128, 128, 8
    $region21: #{tpu_custom_call.1} parent=1 // pred_fallthru
      _
    // Predicated region
    $region22: #{tpu_custom_call.1} parent=1 // pred_check
      _
    $region23: #{tpu_custom_call.1} parent=1 // pred_check_branch
      %60 = sbr.rel (0) target = $region25
    $region24: #{tpu_custom_call.1} parent=1 // pred_region
      %s62 = ssub.s32 2048, 2048
      %63 = vsyncadd [#allocation9], %s62
      %s64 = sshll.u32 [#allocation8], 4
      %s65 = int_to_ptr.vmem [resolvable:$true] %s64
      %70 = dma.hbm_to_vmem [thread:$0]  %s5, 2048, %s65, [#allocation9], 128, 128, 8
    $region25: #{tpu_custom_call.1} parent=1 // pred_fallthru
      _
    // Predicated region
    $region26: #{tpu_custom_call.1} parent=1 // pred_check
      _
    $region27: #{tpu_custom_call.1} parent=1 // pred_check_branch
      %72 = sbr.rel (0) target = $region29
    $region28: #{tpu_custom_call.1} parent=1 // pred_region
      _
    $region29: #{tpu_custom_call.1} parent=1 // pred_fallthru
      _
    // Predicated region
    $region30: #{tpu_custom_call.1} parent=1 // pred_check
      _
    $region31: #{tpu_custom_call.1} parent=1 // pred_check_branch
      %74 = sbr.rel (0) target = $region33
    $region32: #{tpu_custom_call.1} parent=1 // pred_region
      %s76 = ssub.s32 2048, 2048
      %77 = vsyncadd [#allocation9], %s76
      %s78 = sshll.u32 [#allocation10], 4
      %s79 = int_to_ptr.vmem [resolvable:$true] %s78
      %84 = dma.hbm_to_vmem [thread:$0]  %s7, 2048, %s79, [#allocation9], 128, 128, 8
    $region33: #{tpu_custom_call.1} parent=1 // pred_fallthru
      _
    // Predicated region
    $region34: #{tpu_custom_call.1} parent=1 // pred_check
      _
    $region35: #{tpu_custom_call.1} parent=1 // pred_check_branch
      %86 = sbr.rel (0) target = $region37
    $region36: #{tpu_custom_call.1} parent=1 // pred_region
      _
    $region37: #{tpu_custom_call.1} parent=1 // pred_fallthru
      _
    // Predicated region
    $region38: #{tpu_custom_call.1} parent=1 // pred_check
      _
    $region39: #{tpu_custom_call.1} parent=1 // pred_check_branch
      %88 = sbr.rel (0) target = $region41
    $region40: #{tpu_custom_call.1} parent=1 // pred_region
      %s90 = ssub.s32 2048, 2048
      %91 = vsyncadd [#allocation12], %s90
      %s92 = sshll.u32 [#allocation11], 4
      %s93 = int_to_ptr.vmem [resolvable:$true] %s92
      %98 = dma.hbm_to_vmem [thread:$0]  %s9, 2048, %s93, [#allocation12], 128, 128, 8
    $region41: #{tpu_custom_call.1} parent=1 // pred_fallthru
      _
    // Predicated region
    $region42: #{tpu_custom_call.1} parent=1 // pred_check
      _
    $region43: #{tpu_custom_call.1} parent=1 // pred_check_branch
      %100 = sbr.rel (0) target = $region45
    $region44: #{tpu_custom_call.1} parent=1 // pred_region
      _
    $region45: #{tpu_custom_call.1} parent=1 // pred_fallthru
      _
    // Predicated region
    $region46: #{tpu_custom_call.1} parent=1 // pred_check
      _
    $region47: #{tpu_custom_call.1} parent=1 // pred_check_branch
      %102 = sbr.rel (0) target = $region49
    $region48: #{tpu_custom_call.1} parent=1 // pred_region
      %103 = dma.done [#allocation3], 32
    $region49: #{tpu_custom_call.1} parent=1 // pred_fallthru
      _
    // Predicated region
    $region50: #{tpu_custom_call.1} parent=1 // pred_check
      _
    $region51: #{tpu_custom_call.1} parent=1 // pred_check_branch
      %105 = sbr.rel (0) target = $region53
    $region52: #{tpu_custom_call.1} parent=1 // pred_region
      %106 = dma.done [#allocation6], 2048
    $region53: #{tpu_custom_call.1} parent=1 // pred_fallthru
      _
    // Predicated region
    $region54: #{tpu_custom_call.1} parent=1 // pred_check
      _
    $region55: #{tpu_custom_call.1} parent=1 // pred_check_branch
      %108 = sbr.rel (0) target = $region57
    $region56: #{tpu_custom_call.1} parent=1 // pred_region
      %109 = dma.done [#allocation6], 2048
    $region57: #{tpu_custom_call.1} parent=1 // pred_fallthru
      _
    // Predicated region
    $region58: #{tpu_custom_call.1} parent=1 // pred_check
      _
    $region59: #{tpu_custom_call.1} parent=1 // pred_check_branch
      %111 = sbr.rel (0) target = $region61
    $region60: #{tpu_custom_call.1} parent=1 // pred_region
      %112 = dma.done [#allocation9], 2048
    $region61: #{tpu_custom_call.1} parent=1 // pred_fallthru
      _
    // Predicated region
    $region62: #{tpu_custom_call.1} parent=1 // pred_check
      _
    $region63: #{tpu_custom_call.1} parent=1 // pred_check_branch
      %114 = sbr.rel (0) target = $region65
    $region64: #{tpu_custom_call.1} parent=1 // pred_region
      %115 = dma.done [#allocation9], 2048
    $region65: #{tpu_custom_call.1} parent=1 // pred_fallthru
      _
    // Predicated region
    $region66: #{tpu_custom_call.1} parent=1 // pred_check
      _
    $region67: #{tpu_custom_call.1} parent=1 // pred_check_branch
      %117 = sbr.rel (0) target = $region69
    $region68: #{tpu_custom_call.1} parent=1 // pred_region
      %118 = dma.done [#allocation12], 2048
    $region69: #{tpu_custom_call.1} parent=1 // pred_fallthru
      _
    %v119 = vld [vmem:[#allocation2] sm:$0x3]
    %v120 = vld [vmem:[#allocation5] sm:$0xff]
    %v121 = vld [vmem:[#allocation5 + $0x8] sm:$0xff]
    %v122 = vld [vmem:[#allocation5 + $0x10] sm:$0xff]
    %v123 = vld [vmem:[#allocation5 + $0x18] sm:$0xff]
    %v124 = vld [vmem:[#allocation5 + $0x20] sm:$0xff]
    %v125 = vld [vmem:[#allocation5 + $0x28] sm:$0xff]
    %v126 = vld [vmem:[#allocation5 + $0x30] sm:$0xff]
    %v127 = vld [vmem:[#allocation5 + $0x38] sm:$0xff]
    %v128 = vld [vmem:[#allocation5 + $0x40] sm:$0xff]
    %v129 = vld [vmem:[#allocation5 + $0x48] sm:$0xff]
    %v130 = vld [vmem:[#allocation5 + $0x50] sm:$0xff]
    %v131 = vld [vmem:[#allocation5 + $0x58] sm:$0xff]
    %v132 = vld [vmem:[#allocation5 + $0x60] sm:$0xff]
    %v133 = vld [vmem:[#allocation5 + $0x68] sm:$0xff]
    %v134 = vld [vmem:[#allocation5 + $0x70] sm:$0xff]
    %v135 = vld [vmem:[#allocation5 + $0x78] sm:$0xff]
    %v136 = vld [vmem:[%s3] sm:$0x1]
    %v138 = vlaneseq
    %v139 = vshrl.u32 %v138, 7
    %v140 = vsub.s32 0, %v139
    %v141 = vrot.slane %v136, %v140
    %143 = vmatprep.subr.mxu0 0.0
    %144 = vmatpush1.msra.mxu0 %v120
    %145 = vmatprep.subr.mxu0 0.0
    %146 = vmatpush1.msra.mxu0 %v121
    %147 = vmatprep.subr.mxu0 0.0
    %148 = vmatpush1.msra.mxu0 %v122
    %149 = vmatprep.subr.mxu0 0.0
    %150 = vmatpush1.msra.mxu0 %v123
    %151 = vmatprep.subr.mxu0 0.0
    %152 = vmatpush1.msra.mxu0 %v124
    %153 = vmatprep.subr.mxu0 0.0
    %154 = vmatpush1.msra.mxu0 %v125
    %155 = vmatprep.subr.mxu0 0.0
    %156 = vmatpush1.msra.mxu0 %v126
    %157 = vmatprep.subr.mxu0 0.0
    %158 = vmatpush1.msra.mxu0 %v127
    %159 = vmatprep.subr.mxu0 0.0
    %160 = vmatpush1.msra.mxu0 %v128
    %161 = vmatprep.subr.mxu0 0.0
    %162 = vmatpush1.msra.mxu0 %v129
    %163 = vmatprep.subr.mxu0 0.0
    %164 = vmatpush1.msra.mxu0 %v130
    %165 = vmatprep.subr.mxu0 0.0
    %166 = vmatpush1.msra.mxu0 %v131
    %167 = vmatprep.subr.mxu0 0.0
    %168 = vmatpush1.msra.mxu0 %v132
    %169 = vmatprep.subr.mxu0 0.0
    %170 = vmatpush1.msra.mxu0 %v133
    %171 = vmatprep.subr.mxu0 0.0
    %172 = vmatpush1.msra.mxu0 %v134
    %173 = vmatprep.subr.mxu0 0.0
    %174 = vmatpush1.msra.mxu0 %v135
    %175 = vmatprep.subr.mxu0 0.0
    %176 = vmatpush1.msra.mxu0 0.0
    %177 = vmatprep.subr.mxu0 0.0
    %178 = vmatpush1.msra.mxu0 0.0
    %179 = vmatprep.subr.mxu0 0.0
    %180 = vmatpush1.msra.mxu0 0.0
    %181 = vmatprep.subr.mxu0 0.0
    %182 = vmatpush1.msra.mxu0 0.0
    %183 = vmatprep.subr.mxu0 0.0
    %184 = vmatpush1.msra.mxu0 0.0
    %185 = vmatprep.subr.mxu0 0.0
    %186 = vmatpush1.msra.mxu0 0.0
    %187 = vmatprep.subr.mxu0 0.0
    %188 = vmatpush1.msra.mxu0 0.0
    %189 = vmatprep.subr.mxu0 0.0
    %190 = vmatpush1.msra.mxu0 0.0
    %191 = vmatprep.subr.mxu0 0.0
    %192 = vmatpush1.msra.mxu0 0.0
    %193 = vmatprep.subr.mxu0 0.0
    %194 = vmatpush1.msra.mxu0 0.0
    %195 = vmatprep.subr.mxu0 0.0
    %196 = vmatpush1.msra.mxu0 0.0
    %197 = vmatprep.subr.mxu0 0.0
    %198 = vmatpush1.msra.mxu0 0.0
    %199 = vmatprep.subr.mxu0 0.0
    %200 = vmatpush1.msra.mxu0 0.0
    %201 = vmatprep.subr.mxu0 0.0
    %202 = vmatpush1.msra.mxu0 0.0
    %203 = vmatprep.subr.mxu0 0.0
    %204 = vmatpush1.msra.mxu0 0.0
    %205 = vmatprep.subr.mxu0 0.0
    %206 = vmatpush1.msra.mxu0 0.0
    %207 = vmatprep.mubr.f32.mxu0 0.0
    %208 = vmatmul.mubr.f32.gmra.mrb[0].mxu0 %v119
    %v209 = vpop.f32.mrb[0].mxu0
    %v210 = vadd.f32 %v141, %v209
    %v211 = vpop.f32.mrb[0].mxu0
    %212 = vdwg.mxu0
    %v213 = vld [vmem:[#allocation7] sm:$0xff]
    %v214 = vld [vmem:[#allocation7 + $0x8] sm:$0xff]
    %v215 = vld [vmem:[#allocation7 + $0x10] sm:$0xff]
    %v216 = vld [vmem:[#allocation7 + $0x18] sm:$0xff]
    %v217 = vld [vmem:[#allocation7 + $0x20] sm:$0xff]
    %v218 = vld [vmem:[#allocation7 + $0x28] sm:$0xff]
    %v219 = vld [vmem:[#allocation7 + $0x30] sm:$0xff]
    %v220 = vld [vmem:[#allocation7 + $0x38] sm:$0xff]
    %v221 = vld [vmem:[#allocation7 + $0x40] sm:$0xff]
    %v222 = vld [vmem:[#allocation7 + $0x48] sm:$0xff]
    %v223 = vld [vmem:[#allocation7 + $0x50] sm:$0xff]
    %v224 = vld [vmem:[#allocation7 + $0x58] sm:$0xff]
    %v225 = vld [vmem:[#allocation7 + $0x60] sm:$0xff]
    %v226 = vld [vmem:[#allocation7 + $0x68] sm:$0xff]
    %v227 = vld [vmem:[#allocation7 + $0x70] sm:$0xff]
    %v228 = vld [vmem:[#allocation7 + $0x78] sm:$0xff]
    %v229 = vld [vmem:[%s1] sm:$0x3]
    %v230 = vld [vmem:[#allocation8] sm:$0xff]
    %v231 = vld [vmem:[#allocation8 + $0x8] sm:$0xff]
    %v232 = vld [vmem:[#allocation8 + $0x10] sm:$0xff]
    %v233 = vld [vmem:[#allocation8 + $0x18] sm:$0xff]
    %v234 = vld [vmem:[#allocation8 + $0x20] sm:$0xff]
    %v235 = vld [vmem:[#allocation8 + $0x28] sm:$0xff]
    %v236 = vld [vmem:[#allocation8 + $0x30] sm:$0xff]
    %v237 = vld [vmem:[#allocation8 + $0x38] sm:$0xff]
    %v238 = vld [vmem:[#allocation8 + $0x40] sm:$0xff]
    %v239 = vld [vmem:[#allocation8 + $0x48] sm:$0xff]
    %v240 = vld [vmem:[#allocation8 + $0x50] sm:$0xff]
    %v241 = vld [vmem:[#allocation8 + $0x58] sm:$0xff]
    %v242 = vld [vmem:[#allocation8 + $0x60] sm:$0xff]
    %v243 = vld [vmem:[#allocation8 + $0x68] sm:$0xff]
    %v244 = vld [vmem:[#allocation8 + $0x70] sm:$0xff]
    %v245 = vld [vmem:[#allocation8 + $0x78] sm:$0xff]
    %246 = vmatprep.subr.mxu0 0.0
    %247 = vmatpush1.msra.mxu0 %v230
    %248 = vmatprep.subr.mxu0 0.0
    %249 = vmatpush1.msra.mxu0 %v231
    %250 = vmatprep.subr.mxu0 0.0
    %251 = vmatpush1.msra.mxu0 %v232
    %252 = vmatprep.subr.mxu0 0.0
    %253 = vmatpush1.msra.mxu0 %v233
    %254 = vmatprep.subr.mxu0 0.0
    %255 = vmatpush1.msra.mxu0 %v234
    %256 = vmatprep.subr.mxu0 0.0
    %257 = vmatpush1.msra.mxu0 %v235
    %258 = vmatprep.subr.mxu0 0.0
    %259 = vmatpush1.msra.mxu0 %v236
    %260 = vmatprep.subr.mxu0 0.0
    %261 = vmatpush1.msra.mxu0 %v237
    %262 = vmatprep.subr.mxu0 0.0
    %263 = vmatpush1.msra.mxu0 %v238
    %264 = vmatprep.subr.mxu0 0.0
    %265 = vmatpush1.msra.mxu0 %v239
    %266 = vmatprep.subr.mxu0 0.0
    %267 = vmatpush1.msra.mxu0 %v240
    %268 = vmatprep.subr.mxu0 0.0
    %269 = vmatpush1.msra.mxu0 %v241
    %270 = vmatprep.subr.mxu0 0.0
    %271 = vmatpush1.msra.mxu0 %v242
    %272 = vmatprep.subr.mxu0 0.0
    %273 = vmatpush1.msra.mxu0 %v243
    %274 = vmatprep.subr.mxu0 0.0
    %275 = vmatpush1.msra.mxu0 %v244
    %276 = vmatprep.subr.mxu0 0.0
    %277 = vmatpush1.msra.mxu0 %v245
    %278 = vmatprep.subr.mxu0 0.0
    %279 = vmatpush1.msra.mxu0 0.0
    %280 = vmatprep.subr.mxu0 0.0
    %281 = vmatpush1.msra.mxu0 0.0
    %282 = vmatprep.subr.mxu0 0.0
    %283 = vmatpush1.msra.mxu0 0.0
    %284 = vmatprep.subr.mxu0 0.0
    %285 = vmatpush1.msra.mxu0 0.0
    %286 = vmatprep.subr.mxu0 0.0
    %287 = vmatpush1.msra.mxu0 0.0
    %288 = vmatprep.subr.mxu0 0.0
    %289 = vmatpush1.msra.mxu0 0.0
    %290 = vmatprep.subr.mxu0 0.0
    %291 = vmatpush1.msra.mxu0 0.0
    %292 = vmatprep.subr.mxu0 0.0
    %293 = vmatpush1.msra.mxu0 0.0
    %294 = vmatprep.subr.mxu0 0.0
    %295 = vmatpush1.msra.mxu0 0.0
    %296 = vmatprep.subr.mxu0 0.0
    %297 = vmatpush1.msra.mxu0 0.0
    %298 = vmatprep.subr.mxu0 0.0
    %299 = vmatpush1.msra.mxu0 0.0
    %300 = vmatprep.subr.mxu0 0.0
    %301 = vmatpush1.msra.mxu0 0.0
    %302 = vmatprep.subr.mxu0 0.0
    %303 = vmatpush1.msra.mxu0 0.0
    %304 = vmatprep.subr.mxu0 0.0
    %305 = vmatpush1.msra.mxu0 0.0
    %306 = vmatprep.subr.mxu0 0.0
    %307 = vmatpush1.msra.mxu0 0.0
    %308 = vmatprep.subr.mxu0 0.0
    %309 = vmatpush1.msra.mxu0 0.0
    %310 = vmatprep.mubr.f32.mxu0 0.0
    %311 = vmatmul.mubr.f32.gmra.mrb[0].mxu0 %v229
    %v312 = vpop.f32.mrb[0].mxu0
    %v313 = vadd.f32 0.0, %v312
    %v314 = vpop.f32.mrb[0].mxu0
    %315 = vdwg.mxu0
    %316 = vmatprep.subr.mxu0 0.0
    %317 = vmatpush1.msra.mxu0 %v213
    %318 = vmatprep.subr.mxu0 0.0
    %319 = vmatpush1.msra.mxu0 %v214
    %320 = vmatprep.subr.mxu0 0.0
    %321 = vmatpush1.msra.mxu0 %v215
    %322 = vmatprep.subr.mxu0 0.0
    %323 = vmatpush1.msra.mxu0 %v216
    %324 = vmatprep.subr.mxu0 0.0
    %325 = vmatpush1.msra.mxu0 %v217
    %326 = vmatprep.subr.mxu0 0.0
    %327 = vmatpush1.msra.mxu0 %v218
    %328 = vmatprep.subr.mxu0 0.0
    %329 = vmatpush1.msra.mxu0 %v219
    %330 = vmatprep.subr.mxu0 0.0
    %331 = vmatpush1.msra.mxu0 %v220
    %332 = vmatprep.subr.mxu0 0.0
    %333 = vmatpush1.msra.mxu0 %v221
    %334 = vmatprep.subr.mxu0 0.0
    %335 = vmatpush1.msra.mxu0 %v222
    %336 = vmatprep.subr.mxu0 0.0
    %337 = vmatpush1.msra.mxu0 %v223
    %338 = vmatprep.subr.mxu0 0.0
    %339 = vmatpush1.msra.mxu0 %v224
    %340 = vmatprep.subr.mxu0 0.0
    %341 = vmatpush1.msra.mxu0 %v225
    %342 = vmatprep.subr.mxu0 0.0
    %343 = vmatpush1.msra.mxu0 %v226
    %344 = vmatprep.subr.mxu0 0.0
    %345 = vmatpush1.msra.mxu0 %v227
    %346 = vmatprep.subr.mxu0 0.0
    %347 = vmatpush1.msra.mxu0 %v228
    %348 = vmatprep.subr.mxu0 0.0
    %349 = vmatpush1.msra.mxu0 0.0
    %350 = vmatprep.subr.mxu0 0.0
    %351 = vmatpush1.msra.mxu0 0.0
    %352 = vmatprep.subr.mxu0 0.0
    %353 = vmatpush1.msra.mxu0 0.0
    %354 = vmatprep.subr.mxu0 0.0
    %355 = vmatpush1.msra.mxu0 0.0
    %356 = vmatprep.subr.mxu0 0.0
    %357 = vmatpush1.msra.mxu0 0.0
    %358 = vmatprep.subr.mxu0 0.0
    %359 = vmatpush1.msra.mxu0 0.0
    %360 = vmatprep.subr.mxu0 0.0
    %361 = vmatpush1.msra.mxu0 0.0
    %362 = vmatprep.subr.mxu0 0.0
    %363 = vmatpush1.msra.mxu0 0.0
    %364 = vmatprep.subr.mxu0 0.0
    %365 = vmatpush1.msra.mxu0 0.0
    %366 = vmatprep.subr.mxu0 0.0
    %367 = vmatpush1.msra.mxu0 0.0
    %368 = vmatprep.subr.mxu0 0.0
    %369 = vmatpush1.msra.mxu0 0.0
    %370 = vmatprep.subr.mxu0 0.0
    %371 = vmatpush1.msra.mxu0 0.0
    %372 = vmatprep.subr.mxu0 0.0
    %373 = vmatpush1.msra.mxu0 0.0
    %374 = vmatprep.subr.mxu0 0.0
    %375 = vmatpush1.msra.mxu0 0.0
    %376 = vmatprep.subr.mxu0 0.0
    %377 = vmatpush1.msra.mxu0 0.0
    %378 = vmatprep.subr.mxu0 0.0
    %379 = vmatpush1.msra.mxu0 0.0
    %380 = vmatprep.mubr.f32.mxu0 0.0
    %381 = vmatmul.mubr.f32.gmra.mrb[0].mxu0 %v210
    %v382 = vpop.f32.mrb[0].mxu0
    %v383 = vadd.f32 %v313, %v382
    %v384 = vpop.f32.mrb[0].mxu0
    %385 = vdwg.mxu0
    %v386 = vld [vmem:[%s6] sm:$0x1]
    %v388 = vlaneseq
    %v389 = vshrl.u32 %v388, 7
    %v390 = vsub.s32 0, %v389
    %v391 = vrot.slane %v386, %v390
    %v393 = vadd.f32 %v383, %v391
    %v394 = vmax.f32 %v393, 0.0
    %v395 = vld [vmem:[#allocation10] sm:$0xff]
    %v396 = vld [vmem:[#allocation10 + $0x8] sm:$0xff]
    %v397 = vld [vmem:[#allocation10 + $0x10] sm:$0xff]
    %v398 = vld [vmem:[#allocation10 + $0x18] sm:$0xff]
    %v399 = vld [vmem:[#allocation10 + $0x20] sm:$0xff]
    %v400 = vld [vmem:[#allocation10 + $0x28] sm:$0xff]
    %v401 = vld [vmem:[#allocation10 + $0x30] sm:$0xff]
    %v402 = vld [vmem:[#allocation10 + $0x38] sm:$0xff]
    %v403 = vld [vmem:[#allocation10 + $0x40] sm:$0xff]
    %v404 = vld [vmem:[#allocation10 + $0x48] sm:$0xff]
    %v405 = vld [vmem:[#allocation10 + $0x50] sm:$0xff]
    %v406 = vld [vmem:[#allocation10 + $0x58] sm:$0xff]
    %v407 = vld [vmem:[#allocation10 + $0x60] sm:$0xff]
    %v408 = vld [vmem:[#allocation10 + $0x68] sm:$0xff]
    %v409 = vld [vmem:[#allocation10 + $0x70] sm:$0xff]
    %v410 = vld [vmem:[#allocation10 + $0x78] sm:$0xff]
    %v411 = vld [vmem:[%s8] sm:$0x1]
    %v413 = vlaneseq
    %v414 = vshrl.u32 %v413, 7
    %v415 = vsub.s32 0, %v414
    %v416 = vrot.slane %v411, %v415
    %418 = vmatprep.subr.mxu0 0.0
    %419 = vmatpush1.msra.mxu0 %v395
    %420 = vmatprep.subr.mxu0 0.0
    %421 = vmatpush1.msra.mxu0 %v396
    %422 = vmatprep.subr.mxu0 0.0
    %423 = vmatpush1.msra.mxu0 %v397
    %424 = vmatprep.subr.mxu0 0.0
    %425 = vmatpush1.msra.mxu0 %v398
    %426 = vmatprep.subr.mxu0 0.0
    %427 = vmatpush1.msra.mxu0 %v399
    %428 = vmatprep.subr.mxu0 0.0
    %429 = vmatpush1.msra.mxu0 %v400
    %430 = vmatprep.subr.mxu0 0.0
    %431 = vmatpush1.msra.mxu0 %v401
    %432 = vmatprep.subr.mxu0 0.0
    %433 = vmatpush1.msra.mxu0 %v402
    %434 = vmatprep.subr.mxu0 0.0
    %435 = vmatpush1.msra.mxu0 %v403
    %436 = vmatprep.subr.mxu0 0.0
    %437 = vmatpush1.msra.mxu0 %v404
    %438 = vmatprep.subr.mxu0 0.0
    %439 = vmatpush1.msra.mxu0 %v405
    %440 = vmatprep.subr.mxu0 0.0
    %441 = vmatpush1.msra.mxu0 %v406
    %442 = vmatprep.subr.mxu0 0.0
    %443 = vmatpush1.msra.mxu0 %v407
    %444 = vmatprep.subr.mxu0 0.0
    %445 = vmatpush1.msra.mxu0 %v408
    %446 = vmatprep.subr.mxu0 0.0
    %447 = vmatpush1.msra.mxu0 %v409
    %448 = vmatprep.subr.mxu0 0.0
    %449 = vmatpush1.msra.mxu0 %v410
    %450 = vmatprep.subr.mxu0 0.0
    %451 = vmatpush1.msra.mxu0 0.0
    %452 = vmatprep.subr.mxu0 0.0
    %453 = vmatpush1.msra.mxu0 0.0
    %454 = vmatprep.subr.mxu0 0.0
    %455 = vmatpush1.msra.mxu0 0.0
    %456 = vmatprep.subr.mxu0 0.0
    %457 = vmatpush1.msra.mxu0 0.0
    %458 = vmatprep.subr.mxu0 0.0
    %459 = vmatpush1.msra.mxu0 0.0
    %460 = vmatprep.subr.mxu0 0.0
    %461 = vmatpush1.msra.mxu0 0.0
    %462 = vmatprep.subr.mxu0 0.0
    %463 = vmatpush1.msra.mxu0 0.0
    %464 = vmatprep.subr.mxu0 0.0
    %465 = vmatpush1.msra.mxu0 0.0
    %466 = vmatprep.subr.mxu0 0.0
    %467 = vmatpush1.msra.mxu0 0.0
    %468 = vmatprep.subr.mxu0 0.0
    %469 = vmatpush1.msra.mxu0 0.0
    %470 = vmatprep.subr.mxu0 0.0
    %471 = vmatpush1.msra.mxu0 0.0
    %472 = vmatprep.subr.mxu0 0.0
    %473 = vmatpush1.msra.mxu0 0.0
    %474 = vmatprep.subr.mxu0 0.0
    %475 = vmatpush1.msra.mxu0 0.0
    %476 = vmatprep.subr.mxu0 0.0
    %477 = vmatpush1.msra.mxu0 0.0
    %478 = vmatprep.subr.mxu0 0.0
    %479 = vmatpush1.msra.mxu0 0.0
    %480 = vmatprep.subr.mxu0 0.0
    %481 = vmatpush1.msra.mxu0 0.0
    %482 = vmatprep.mubr.f32.mxu0 0.0
    %483 = vmatmul.mubr.f32.gmra.mrb[0].mxu0 %v394
    %v484 = vpop.f32.mrb[0].mxu0
    %v485 = vadd.f32 %v416, %v484
    %v486 = vpop.f32.mrb[0].mxu0
    %487 = vdwg.mxu0
    %v488 = vmax.f32 %v485, 0.0
    %v489 = vld [vmem:[#allocation11] sm:$0xff]
    %v490 = vld [vmem:[#allocation11 + $0x8] sm:$0xff]
    %v491 = vld [vmem:[#allocation11 + $0x10] sm:$0xff]
    %v492 = vld [vmem:[#allocation11 + $0x18] sm:$0xff]
    %v493 = vld [vmem:[#allocation11 + $0x20] sm:$0xff]
    %v494 = vld [vmem:[#allocation11 + $0x28] sm:$0xff]
    %v495 = vld [vmem:[#allocation11 + $0x30] sm:$0xff]
    %v496 = vld [vmem:[#allocation11 + $0x38] sm:$0xff]
    %v497 = vld [vmem:[#allocation11 + $0x40] sm:$0xff]
    %v498 = vld [vmem:[#allocation11 + $0x48] sm:$0xff]
    %v499 = vld [vmem:[#allocation11 + $0x50] sm:$0xff]
    %v500 = vld [vmem:[#allocation11 + $0x58] sm:$0xff]
    %v501 = vld [vmem:[#allocation11 + $0x60] sm:$0xff]
    %v502 = vld [vmem:[#allocation11 + $0x68] sm:$0xff]
    %v503 = vld [vmem:[#allocation11 + $0x70] sm:$0xff]
    %v504 = vld [vmem:[#allocation11 + $0x78] sm:$0xff]
    %v505 = vld [vmem:[%s10] sm:$0x1]
    %v507 = vlaneseq
    %v508 = vshrl.u32 %v507, 7
    %v509 = vsub.s32 0, %v508
    %v510 = vrot.slane %v505, %v509
    %512 = vmatprep.subr.mxu0 0.0
    %513 = vmatpush1.msra.mxu0 %v489
    %514 = vmatprep.subr.mxu0 0.0
    %515 = vmatpush1.msra.mxu0 %v490
    %516 = vmatprep.subr.mxu0 0.0
    %517 = vmatpush1.msra.mxu0 %v491
    %518 = vmatprep.subr.mxu0 0.0
    %519 = vmatpush1.msra.mxu0 %v492
    %520 = vmatprep.subr.mxu0 0.0
    %521 = vmatpush1.msra.mxu0 %v493
    %522 = vmatprep.subr.mxu0 0.0
    %523 = vmatpush1.msra.mxu0 %v494
    %524 = vmatprep.subr.mxu0 0.0
    %525 = vmatpush1.msra.mxu0 %v495
    %526 = vmatprep.subr.mxu0 0.0
    %527 = vmatpush1.msra.mxu0 %v496
    %528 = vmatprep.subr.mxu0 0.0
    %529 = vmatpush1.msra.mxu0 %v497
    %530 = vmatprep.subr.mxu0 0.0
    %531 = vmatpush1.msra.mxu0 %v498
    %532 = vmatprep.subr.mxu0 0.0
    %533 = vmatpush1.msra.mxu0 %v499
    %534 = vmatprep.subr.mxu0 0.0
    %535 = vmatpush1.msra.mxu0 %v500
    %536 = vmatprep.subr.mxu0 0.0
    %537 = vmatpush1.msra.mxu0 %v501
    %538 = vmatprep.subr.mxu0 0.0
    %539 = vmatpush1.msra.mxu0 %v502
    %540 = vmatprep.subr.mxu0 0.0
    %541 = vmatpush1.msra.mxu0 %v503
    %542 = vmatprep.subr.mxu0 0.0
    %543 = vmatpush1.msra.mxu0 %v504
    %544 = vmatprep.subr.mxu0 0.0
    %545 = vmatpush1.msra.mxu0 0.0
    %546 = vmatprep.subr.mxu0 0.0
    %547 = vmatpush1.msra.mxu0 0.0
    %548 = vmatprep.subr.mxu0 0.0
    %549 = vmatpush1.msra.mxu0 0.0
    %550 = vmatprep.subr.mxu0 0.0
    %551 = vmatpush1.msra.mxu0 0.0
    %552 = vmatprep.subr.mxu0 0.0
    %553 = vmatpush1.msra.mxu0 0.0
    %554 = vmatprep.subr.mxu0 0.0
    %555 = vmatpush1.msra.mxu0 0.0
    %556 = vmatprep.subr.mxu0 0.0
    %557 = vmatpush1.msra.mxu0 0.0
    %558 = vmatprep.subr.mxu0 0.0
    %559 = vmatpush1.msra.mxu0 0.0
    %560 = vmatprep.subr.mxu0 0.0
    %561 = vmatpush1.msra.mxu0 0.0
    %562 = vmatprep.subr.mxu0 0.0
    %563 = vmatpush1.msra.mxu0 0.0
    %564 = vmatprep.subr.mxu0 0.0
    %565 = vmatpush1.msra.mxu0 0.0
    %566 = vmatprep.subr.mxu0 0.0
    %567 = vmatpush1.msra.mxu0 0.0
    %568 = vmatprep.subr.mxu0 0.0
    %569 = vmatpush1.msra.mxu0 0.0
    %570 = vmatprep.subr.mxu0 0.0
    %571 = vmatpush1.msra.mxu0 0.0
    %572 = vmatprep.subr.mxu0 0.0
    %573 = vmatpush1.msra.mxu0 0.0
    %574 = vmatprep.subr.mxu0 0.0
    %575 = vmatpush1.msra.mxu0 0.0
    %576 = vmatprep.mubr.f32.mxu0 0.0
    %577 = vmatmul.mubr.f32.gmra.mrb[0].mxu0 %v488
    %v578 = vpop.f32.mrb[0].mxu0
    %v579 = vadd.f32 %v510, %v578
    %v580 = vpop.f32.mrb[0].mxu0
    %581 = vdwg.mxu0
    %582 = vst [vmem:[#allocation13] sm:$0x3] %v579
    // Predicated region
    $region70: #{tpu_custom_call.1} parent=1 // pred_check
      _
    $region71: #{tpu_custom_call.1} parent=1 // pred_check_branch
      %584 = sbr.rel (0) target = $region73
    $region72: #{tpu_custom_call.1} parent=1 // pred_region
      %s586 = ssub.s32 32, 32
      %587 = vsyncadd [#allocation4], %s586
      %s589 = sshll.u32 [#allocation13], 4
      %s590 = int_to_ptr.vmem [resolvable:$true] %s589
      %592 = dma.vmem_to_hbm [thread:$0]  %s590, 32, %s11, [#allocation4]
    $region73: #{tpu_custom_call.1} parent=1 // pred_fallthru
      _
    // Predicated region
    $region74: #{tpu_custom_call.1} parent=1 // pred_check
      _
    $region75: #{tpu_custom_call.1} parent=1 // pred_check_branch
      %594 = sbr.rel (0) target = $region77
    $region76: #{tpu_custom_call.1} parent=1 // pred_region
      %595 = dma.done [#allocation4], 32
    $region77: #{tpu_custom_call.1} parent=1 // pred_fallthru
      _
    %596 = vsyncpa [#allocation3], 1
    %597 = vsyncpa [#allocation6], 1
    %598 = vsyncpa [#allocation9], 1
    %599 = vsyncpa [#allocation12], 1
    %600 = vsyncpa [#allocation4], 1

</llo_original>
